<compile_context>
chip_gen: v6e
topology: v6e:2x2x1
jax: 0.10.0
libtpu: 0.0.40
codegen_flags: <defaults>
</compile_context>

<pallas_src>
import jax
import jax.numpy as jnp
from jax import lax
from jax.experimental import pallas as pl
from jax.experimental.pallas import tpu as pltpu


_VMEM_LIMIT = 32 * 1024 * 1024   # explicit scoped-VMEM budget, safe on v5e/v6e/v7x
_GATHER_CHUNK = 128              # word-embedding rows gathered per grid step
_N_DMA_SEM = 32                  # rotating DMA semaphores -> up to 32 copies in flight


def _round_up(x, m):
    return ((x + m - 1) // m) * m


# ---------------------------------------------------------------------------
# Embedding lookup: DMA row-gather from an HBM-resident table, straight into
# the pipelined output block (no staging buffer, no vector stores).
# ---------------------------------------------------------------------------
def _gather_kernel(ids_ref, table_ref, out_ref, sems):
    c = pl.program_id(0)
    chunk = out_ref.shape[0]
    base = c * chunk

    descs = []
    for i in range(chunk):
        if i >= _N_DMA_SEM:
            descs[i - _N_DMA_SEM].wait()          # retire before reusing its semaphore
        row = ids_ref[base + i]
        d = pltpu.make_async_copy(
            table_ref.at[pl.ds(row, 1), :],
            out_ref.at[pl.ds(i, 1), :],
            sems.at[i % _N_DMA_SEM])
        d.start()
        descs.append(d)
    for i in range(max(0, chunk - _N_DMA_SEM), chunk):
        descs[i].wait()


def embedding_lookup(ids, table, chunk=_GATHER_CHUNK):
    """ids: int [N]; table: [vocab, dim] (kept in HBM) -> [N, dim]."""
    n = ids.shape[0]
    vocab, dim = table.shape
    ids = jnp.clip(ids.astype(jnp.int32), 0, vocab - 1)   # bounds-safe gather

    chunk_eff = min(chunk, _round_up(n, 8))                # small inputs: one block
    n_pad = _round_up(n, chunk_eff)
    if n_pad != n:
        ids = jnp.pad(ids, (0, n_pad - n))                 # pad ids -> row 0 (zeros)

    out = pl.pallas_call(
        _gather_kernel,
        out_shape=jax.ShapeDtypeStruct((n_pad, dim), table.dtype),
        grid_spec=pltpu.PrefetchScalarGridSpec(
            num_scalar_prefetch=1,
            grid=(n_pad // chunk_eff,),
            in_specs=[pl.BlockSpec(memory_space=pl.ANY)],      # table stays in HBM
            out_specs=pl.BlockSpec((chunk_eff, dim), lambda c, ids: (c, 0)),
            scratch_shapes=[pltpu.SemaphoreType.DMA((_N_DMA_SEM,))],
        ),
        compiler_params=pltpu.CompilerParams(
            dimension_semantics=("parallel",),   # chunks independent -> 2 TCs on v7x
            vmem_limit_bytes=_VMEM_LIMIT,
        ),
    )(ids, table)
    return out[:n]


# ---------------------------------------------------------------------------
# Fused char-embedding gather + bidirectional LSTM (single sequence).
#
# Fused parameter layout (H = char_dim // 2, G = 8*H):
#   wih_cat [D, G]  : x-projection, both directions; column blocks of width H
#                     interleaved [i_f, i_b, f_f, f_b, g_f, g_b, o_f, o_b]
#   whh_bd  [2H, G] : block-diagonal recurrent weights; rows 0:H (h_fwd) feed
#                     only *_f columns, rows H:2H (h_bwd) only *_b columns
#   b_cat   [1, G]  : (b_ih + b_hh), same column layout
# Carried state h, c are [1, 2H] = [fwd | bwd].
# ---------------------------------------------------------------------------
def _char_bilstm_kernel(ids_ref, table_ref, wih_ref, whh_ref, b_ref,
                        out_ref, x_buf, xr_buf, gx_ref, hf_buf, hb_buf, sems):
    S = out_ref.shape[0]
    G = wih_ref.shape[1]
    H = G // 8
    nsem = sems.shape[0]

    # ---- 1. gather: each char row goes to x_buf[t] and xr_buf[S-1-t] --------
    descs = []

    def _issue(row, dst_ref, dst_row):
        k = len(descs)
        if k >= nsem:
            descs[k - nsem].wait()
        d = pltpu.make_async_copy(
            table_ref.at[pl.ds(row, 1), :],
            dst_ref.at[pl.ds(dst_row, 1), :],
            sems.at[k % nsem])
        d.start()
        descs.append(d)

    for t in range(S):
        row = ids_ref[t]
        _issue(row, x_buf, t)
        _issue(row, xr_buf, S - 1 - t)
    for d in descs[max(0, len(descs) - nsem):]:
        d.wait()

    # ---- 2. hoisted input projection + fwd/bwd column pre-selection ---------
    # gx_sel[t] = fwd columns from x[t] @ wih, bwd columns from x[S-1-t] @ wih.
    lane = lax.broadcasted_iota(jnp.int32, (S, G), 1)
    is_fwd_col = ((lane // H) % 2) == 0
    gxf = jnp.dot(x_buf[...], wih_ref[...], preferred_element_type=jnp.float32)
    gxb = jnp.dot(xr_buf[...], wih_ref[...], preferred_element_type=jnp.float32)
    gx_ref[...] = jnp.where(is_fwd_col, gxf, gxb) + b_ref[...]

    # ---- 3. fully unrolled fused fwd+bwd recurrence --------------------------
    whh = whh_ref[...]                                      # loaded once, [2H, G]
    h = jnp.zeros((1, 2 * H), jnp.float32)
    c = jnp.zeros((1, 2 * H), jnp.float32)
    for t in range(S):                                      # S static & small
        gates = gx_ref[pl.ds(t, 1), :] + jnp.dot(
            h, whh, preferred_element_type=jnp.float32)     # [1, 8H]
        sig = jax.nn.sigmoid(gates)                         # one EUP pass each
        tah = jnp.tanh(gates)
        i_g = sig[:, 0:2 * H]
        f_g = sig[:, 2 * H:4 * H]
        g_g = tah[:, 4 * H:6 * H]
        o_g = sig[:, 6 * H:8 * H]
        c = f_g * c + i_g * g_g
        h = o_g * jnp.tanh(c)
        hf_buf[pl.ds(t, 1), :] = h[:, 0:H]                  # fwd hidden at t
        hb_buf[pl.ds(S - 1 - t, 1), :] = h[:, H:2 * H]      # bwd hidden at S-1-t

    # ---- 4. one bulk output store --------------------------------------------
    out_ref[...] = jnp.concatenate([hf_buf[...], hb_buf[...]], axis=-1)


def char_embed_bilstm(char_ids, table, wih_cat, whh_bd, b_cat):
    """char_ids [S] int -> [S, 2H] BiLSTM features of the char embeddings."""
    S = char_ids.shape[0]
    vocab, D = table.shape
    G = wih_cat.shape[1]
    H2 = G // 4
    ids = jnp.clip(char_ids.astype(jnp.int32), 0, vocab - 1)
    return pl.pallas_call(
        _char_bilstm_kernel,
        out_shape=jax.ShapeDtypeStruct((S, H2), jnp.float32),
        grid_spec=pltpu.PrefetchScalarGridSpec(
            num_scalar_prefetch=1,
            grid=(1,),
            in_specs=[
                pl.BlockSpec(memory_space=pl.ANY),               # char table (HBM)
                pl.BlockSpec((D, G), lambda i, ids: (0, 0)),     # wih_cat
                pl.BlockSpec((H2, G), lambda i, ids: (0, 0)),    # whh_bd
                pl.BlockSpec((1, G), lambda i, ids: (0, 0)),     # b_cat
            ],
            out_specs=pl.BlockSpec((S, H2), lambda i, ids: (0, 0)),
            scratch_shapes=[
                pltpu.VMEM((S, D), jnp.float32),        # gathered char embeddings
                pltpu.VMEM((S, D), jnp.float32),        # reversed char embeddings
                pltpu.VMEM((S, G), jnp.float32),        # pre-selected input projection
                pltpu.VMEM((S, H2 // 2), jnp.float32),  # fwd hidden states
                pltpu.VMEM((S, H2 // 2), jnp.float32),  # bwd hidden states
                pltpu.SemaphoreType.DMA((_N_DMA_SEM,)),
            ],
        ),
        compiler_params=pltpu.CompilerParams(
            dimension_semantics=("arbitrary",),
            vmem_limit_bytes=_VMEM_LIMIT,
        ),
    )(ids, table, wih_cat, whh_bd, b_cat)


# ---------------------------------------------------------------------------
# Module wrapper (deterministic synthetic parameters)
# ---------------------------------------------------------------------------
class MergeEmbeddingPallas:
    def __init__(self, key, char_vocab, word_vocab, char_dim=32, word_dim=32):
        assert char_dim % 2 == 0
        self.char_dim = char_dim
        self.word_dim = word_dim
        H = char_dim // 2
        self.H = H

        keys = jax.random.split(key, 10)
        # Embedding tables (padding_idx=0 -> row 0 zeroed), frozen (fine_tune=False).
        char_tab = 0.1 * jax.random.normal(keys[0], (char_vocab, char_dim), jnp.float32)
        word_tab = 0.1 * jax.random.normal(keys[1], (word_vocab, word_dim), jnp.float32)
        self.char_table = char_tab.at[0].set(0.0)
        self.word_table = word_tab.at[0].set(0.0)

        # Bidirectional LSTM params, PyTorch init U(-1/sqrt(H), 1/sqrt(H)),
        # gate row order [i, f, g, o].
        k = 1.0 / jnp.sqrt(jnp.float32(H))

        def u(kk, shape):
            return jax.random.uniform(kk, shape, jnp.float32, -k, k)

        # raw (PyTorch-layout) per-direction params — kept for the reference
        self.w_ih_f = u(keys[2], (4 * H, char_dim))
        self.w_hh_f = u(keys[3], (4 * H, H))
        self.b_f = u(keys[4], (4 * H,)) + u(keys[5], (4 * H,))   # b_ih + b_hh
        self.w_ih_b = u(keys[6], (4 * H, char_dim))
        self.w_hh_b = u(keys[7], (4 * H, H))
        self.b_b = u(keys[8], (4 * H,)) + u(keys[9], (4 * H,))

        # ---- fused kernel layout: columns [i_f,i_b,f_f,f_b,g_f,g_b,o_f,o_b] ----
        def interleave_gate_cols(mf, mb):    # [4H, in] x2 -> [in, 8H]
            blocks = []
            for g in range(4):
                blocks.append(mf[g * H:(g + 1) * H, :].T)
                blocks.append(mb[g * H:(g + 1) * H, :].T)
            return jnp.concatenate(blocks, axis=1)

        self.wih_cat = interleave_gate_cols(self.w_ih_f, self.w_ih_b)   # [D, 8H]

        whh_bd = jnp.zeros((2 * H, 8 * H), jnp.float32)
        for g in range(4):
            whh_bd = whh_bd.at[0:H, 2 * g * H:(2 * g + 1) * H].set(
                self.w_hh_f[g * H:(g + 1) * H, :].T)
            whh_bd = whh_bd.at[H:2 * H, (2 * g + 1) * H:(2 * g + 2) * H].set(
                self.w_hh_b[g * H:(g + 1) * H, :].T)
        self.whh_bd = whh_bd                                            # [2H, 8H]

        b_blocks = []
        for g in range(4):
            b_blocks.append(self.b_f[g * H:(g + 1) * H])
            b_blocks.append(self.b_b[g * H:(g + 1) * H])
        self.b_cat = jnp.concatenate(b_blocks).reshape(1, 8 * H)        # [1, 8H]

    def __call__(self, word_seq, char_seq, char_len_seq):
        """word_seq: int [batch, seq_len]; char_seq: int [s]; char_len_seq: int [...]."""
        B, L = word_seq.shape
        word_emb = embedding_lookup(word_seq.reshape(-1), self.word_table)
        word_emb = word_emb.reshape(B, L, self.word_dim)

        # fused: char embedding gather + BiLSTM in one pallas_call
        char_feat = char_embed_bilstm(char_seq, self.char_table,
                                      self.wih_cat, self.whh_bd, self.b_cat)
        # TODO(synk): original forward body is empty; merge rule / use of
        # char_len_seq (packing) is unspecified, so we return both features.
        return word_emb, char_feat


# ---------------------------------------------------------------------------
# Pure-JAX references for verification (raw per-direction weights)
# ---------------------------------------------------------------------------
def _lstm_dir_ref(x, w_ih, w_hh, b, H):
    def step(carry, x_t):
        h, c = carry
        g = x_t @ w_ih.T + h @ w_hh.T + b
        i = jax.nn.sigmoid(g[0:H])
        f = jax.nn.sigmoid(g[H:2 * H])
        gg = jnp.tanh(g[2 * H:3 * H])
        o = jax.nn.sigmoid(g[3 * H:4 * H])
        c = f * c + i * gg
        h = o * jnp.tanh(c)
        return (h, c), h

    (_, _), hs = lax.scan(step, (jnp.zeros(H), jnp.zeros(H)), x)
    return hs


def bilstm_ref(x, w_ih_f, w_hh_f, b_f, w_ih_b, w_hh_b, b_b):
    H = w_hh_f.shape[1]
    fwd = _lstm_dir_ref(x, w_ih_f, w_hh_f, b_f, H)
    bwd = _lstm_dir_ref(x[::-1], w_ih_b, w_hh_b, b_b, H)[::-1]
    return jnp.concatenate([fwd, bwd], axis=-1)


if __name__ == "__main__":
    key = jax.random.PRNGKey(0)
    k_params, k_word, k_char = jax.random.split(key, 3)

    char_vocab, word_vocab = 20, 30
    char_dim, word_dim = 32, 32
    batch, seq_len, s = 2, 8, 10

    model = MergeEmbeddingPallas(k_params, char_vocab, word_vocab,
                                 char_dim=char_dim, word_dim=word_dim)

    word_seq = jax.random.randint(k_word, (batch, seq_len), 0, word_vocab, jnp.int32)
    char_seq = jax.random.randint(k_char, (s,), 0, char_vocab, jnp.int32)
    char_len_seq = jnp.array([s], jnp.int32)

    word_emb, char_feat = model(word_seq, char_seq, char_len_seq)
    jax.block_until_ready((word_emb, char_feat))

    # verify against pure-JAX references
    word_ref = model.word_table[word_seq.reshape(-1)].reshape(batch, seq_len, word_dim)
    char_emb_ref = model.char_table[char_seq]
    char_ref = bilstm_ref(char_emb_ref,
                          model.w_ih_f, model.w_hh_f, model.b_f,
                          model.w_ih_b, model.w_hh_b, model.b_b)

    assert word_emb.shape == (batch, seq_len, word_dim)
    assert char_feat.shape == (s, char_dim)
    assert jnp.allclose(word_emb, word_ref, atol=1e-4, rtol=1e-4)
    assert jnp.allclose(char_feat, char_ref, atol=1e-4, rtol=1e-4)

    print("KERNEL_OK")
</pallas_src>

<mosaic_0001>
module attributes {stable_mosaic.version = 11 : i64} {
  func.func @_gather_kernel(%arg0: i32, %arg1: memref<16xi32, #tpu.memory_space<smem>>, %arg2: memref<30x32xf32, #tpu.memory_space<any>>, %arg3: memref<16x32xf32, #tpu.memory_space<vmem>>, %arg4: memref<32x!tpu.dma_semaphore, #tpu.memory_space<semaphore_mem>>) attributes {dimension_semantics = [#tpu.dimension_semantics<parallel>], iteration_bounds = array<i64: 1>, scalar_prefetch = 1 : i64, scratch_operands = 1 : i64, tpu.core_type = #tpu.core_type<tc>, window_params = [{}, {transform_indices = @transform_1, window_bounds = array<i64: 16, 32>}]} {
    %c16_i32 = arith.constant 16 : i32
    %0 = arith.muli %arg0, %c16_i32 : i32
    %c0_i32 = arith.constant 0 : i32
    %1 = arith.addi %0, %c0_i32 : i32
    %2 = arith.index_cast %1 : i32 to index
    %3 = memref.load %arg1[%2] : memref<16xi32, #tpu.memory_space<smem>>
    %c0_i32_0 = arith.constant 0 : i32
    %c0_i32_1 = arith.constant 0 : i32
    %4 = tpu.memref_slice %arg2[%3, %c0_i32_1] : memref<30x32xf32, #tpu.memory_space<any>> -> memref<1x32xf32, #tpu.memory_space<any>>
    %c0_i32_2 = arith.constant 0 : i32
    %c0_i32_3 = arith.constant 0 : i32
    %5 = tpu.memref_slice %arg3[%c0_i32_2, %c0_i32_3] : memref<16x32xf32, #tpu.memory_space<vmem>> -> memref<1x32xf32, #tpu.memory_space<vmem>>
    %6 = tpu.memref_slice %arg4[%c0_i32_0] : memref<32x!tpu.dma_semaphore, #tpu.memory_space<semaphore_mem>> -> memref<1x!tpu.dma_semaphore, #tpu.memory_space<semaphore_mem>>
    %7 = tpu.memref_squeeze %6 : memref<1x!tpu.dma_semaphore, #tpu.memory_space<semaphore_mem>> -> memref<!tpu.dma_semaphore, #tpu.memory_space<semaphore_mem>>
    tpu.enqueue_dma source(%4 : memref<1x32xf32, #tpu.memory_space<any>>) target(%5 : memref<1x32xf32, #tpu.memory_space<vmem>>) target_semaphore(%7 : memref<!tpu.dma_semaphore, #tpu.memory_space<semaphore_mem>>)
    %c1_i32 = arith.constant 1 : i32
    %8 = arith.addi %0, %c1_i32 : i32
    %9 = arith.index_cast %8 : i32 to index
    %10 = memref.load %arg1[%9] : memref<16xi32, #tpu.memory_space<smem>>
    %c1_i32_4 = arith.constant 1 : i32
    %c0_i32_5 = arith.constant 0 : i32
    %11 = tpu.memref_slice %arg2[%10, %c0_i32_5] : memref<30x32xf32, #tpu.memory_space<any>> -> memref<1x32xf32, #tpu.memory_space<any>>
    %c1_i32_6 = arith.constant 1 : i32
    %c0_i32_7 = arith.constant 0 : i32
    %12 = tpu.memref_slice %arg3[%c1_i32_6, %c0_i32_7] : memref<16x32xf32, #tpu.memory_space<vmem>> -> memref<1x32xf32, #tpu.memory_space<vmem>>
    %13 = tpu.memref_slice %arg4[%c1_i32_4] : memref<32x!tpu.dma_semaphore, #tpu.memory_space<semaphore_mem>> -> memref<1x!tpu.dma_semaphore, #tpu.memory_space<semaphore_mem>>
    %14 = tpu.memref_squeeze %13 : memref<1x!tpu.dma_semaphore, #tpu.memory_space<semaphore_mem>> -> memref<!tpu.dma_semaphore, #tpu.memory_space<semaphore_mem>>
    tpu.enqueue_dma source(%11 : memref<1x32xf32, #tpu.memory_space<any>>) target(%12 : memref<1x32xf32, #tpu.memory_space<vmem>>) target_semaphore(%14 : memref<!tpu.dma_semaphore, #tpu.memory_space<semaphore_mem>>)
    %c2_i32 = arith.constant 2 : i32
    %15 = arith.addi %0, %c2_i32 : i32
    %16 = arith.index_cast %15 : i32 to index
    %17 = memref.load %arg1[%16] : memref<16xi32, #tpu.memory_space<smem>>
    %c2_i32_8 = arith.constant 2 : i32
    %c0_i32_9 = arith.constant 0 : i32
    %18 = tpu.memref_slice %arg2[%17, %c0_i32_9] : memref<30x32xf32, #tpu.memory_space<any>> -> memref<1x32xf32, #tpu.memory_space<any>>
    %c2_i32_10 = arith.constant 2 : i32
    %c0_i32_11 = arith.constant 0 : i32
    %19 = tpu.memref_slice %arg3[%c2_i32_10, %c0_i32_11] : memref<16x32xf32, #tpu.memory_space<vmem>> -> memref<1x32xf32, #tpu.memory_space<vmem>>
    %20 = tpu.memref_slice %arg4[%c2_i32_8] : memref<32x!tpu.dma_semaphore, #tpu.memory_space<semaphore_mem>> -> memref<1x!tpu.dma_semaphore, #tpu.memory_space<semaphore_mem>>
    %21 = tpu.memref_squeeze %20 : memref<1x!tpu.dma_semaphore, #tpu.memory_space<semaphore_mem>> -> memref<!tpu.dma_semaphore, #tpu.memory_space<semaphore_mem>>
    tpu.enqueue_dma source(%18 : memref<1x32xf32, #tpu.memory_space<any>>) target(%19 : memref<1x32xf32, #tpu.memory_space<vmem>>) target_semaphore(%21 : memref<!tpu.dma_semaphore, #tpu.memory_space<semaphore_mem>>)
    %c3_i32 = arith.constant 3 : i32
    %22 = arith.addi %0, %c3_i32 : i32
    %23 = arith.index_cast %22 : i32 to index
    %24 = memref.load %arg1[%23] : memref<16xi32, #tpu.memory_space<smem>>
    %c3_i32_12 = arith.constant 3 : i32
    %c0_i32_13 = arith.constant 0 : i32
    %25 = tpu.memref_slice %arg2[%24, %c0_i32_13] : memref<30x32xf32, #tpu.memory_space<any>> -> memref<1x32xf32, #tpu.memory_space<any>>
    %c3_i32_14 = arith.constant 3 : i32
    %c0_i32_15 = arith.constant 0 : i32
    %26 = tpu.memref_slice %arg3[%c3_i32_14, %c0_i32_15] : memref<16x32xf32, #tpu.memory_space<vmem>> -> memref<1x32xf32, #tpu.memory_space<vmem>>
    %27 = tpu.memref_slice %arg4[%c3_i32_12] : memref<32x!tpu.dma_semaphore, #tpu.memory_space<semaphore_mem>> -> memref<1x!tpu.dma_semaphore, #tpu.memory_space<semaphore_mem>>
    %28 = tpu.memref_squeeze %27 : memref<1x!tpu.dma_semaphore, #tpu.memory_space<semaphore_mem>> -> memref<!tpu.dma_semaphore, #tpu.memory_space<semaphore_mem>>
    tpu.enqueue_dma source(%25 : memref<1x32xf32, #tpu.memory_space<any>>) target(%26 : memref<1x32xf32, #tpu.memory_space<vmem>>) target_semaphore(%28 : memref<!tpu.dma_semaphore, #tpu.memory_space<semaphore_mem>>)
    %c4_i32 = arith.constant 4 : i32
    %29 = arith.addi %0, %c4_i32 : i32
    %30 = arith.index_cast %29 : i32 to index
    %31 = memref.load %arg1[%30] : memref<16xi32, #tpu.memory_space<smem>>
    %c4_i32_16 = arith.constant 4 : i32
    %c0_i32_17 = arith.constant 0 : i32
    %32 = tpu.memref_slice %arg2[%31, %c0_i32_17] : memref<30x32xf32, #tpu.memory_space<any>> -> memref<1x32xf32, #tpu.memory_space<any>>
    %c4_i32_18 = arith.constant 4 : i32
    %c0_i32_19 = arith.constant 0 : i32
    %33 = tpu.memref_slice %arg3[%c4_i32_18, %c0_i32_19] : memref<16x32xf32, #tpu.memory_space<vmem>> -> memref<1x32xf32, #tpu.memory_space<vmem>>
    %34 = tpu.memref_slice %arg4[%c4_i32_16] : memref<32x!tpu.dma_semaphore, #tpu.memory_space<semaphore_mem>> -> memref<1x!tpu.dma_semaphore, #tpu.memory_space<semaphore_mem>>
    %35 = tpu.memref_squeeze %34 : memref<1x!tpu.dma_semaphore, #tpu.memory_space<semaphore_mem>> -> memref<!tpu.dma_semaphore, #tpu.memory_space<semaphore_mem>>
    tpu.enqueue_dma source(%32 : memref<1x32xf32, #tpu.memory_space<any>>) target(%33 : memref<1x32xf32, #tpu.memory_space<vmem>>) target_semaphore(%35 : memref<!tpu.dma_semaphore, #tpu.memory_space<semaphore_mem>>)
    %c5_i32 = arith.constant 5 : i32
    %36 = arith.addi %0, %c5_i32 : i32
    %37 = arith.index_cast %36 : i32 to index
    %38 = memref.load %arg1[%37] : memref<16xi32, #tpu.memory_space<smem>>
    %c5_i32_20 = arith.constant 5 : i32
    %c0_i32_21 = arith.constant 0 : i32
    %39 = tpu.memref_slice %arg2[%38, %c0_i32_21] : memref<30x32xf32, #tpu.memory_space<any>> -> memref<1x32xf32, #tpu.memory_space<any>>
    %c5_i32_22 = arith.constant 5 : i32
    %c0_i32_23 = arith.constant 0 : i32
    %40 = tpu.memref_slice %arg3[%c5_i32_22, %c0_i32_23] : memref<16x32xf32, #tpu.memory_space<vmem>> -> memref<1x32xf32, #tpu.memory_space<vmem>>
    %41 = tpu.memref_slice %arg4[%c5_i32_20] : memref<32x!tpu.dma_semaphore, #tpu.memory_space<semaphore_mem>> -> memref<1x!tpu.dma_semaphore, #tpu.memory_space<semaphore_mem>>
    %42 = tpu.memref_squeeze %41 : memref<1x!tpu.dma_semaphore, #tpu.memory_space<semaphore_mem>> -> memref<!tpu.dma_semaphore, #tpu.memory_space<semaphore_mem>>
    tpu.enqueue_dma source(%39 : memref<1x32xf32, #tpu.memory_space<any>>) target(%40 : memref<1x32xf32, #tpu.memory_space<vmem>>) target_semaphore(%42 : memref<!tpu.dma_semaphore, #tpu.memory_space<semaphore_mem>>)
    %c6_i32 = arith.constant 6 : i32
    %43 = arith.addi %0, %c6_i32 : i32
    %44 = arith.index_cast %43 : i32 to index
    %45 = memref.load %arg1[%44] : memref<16xi32, #tpu.memory_space<smem>>
    %c6_i32_24 = arith.constant 6 : i32
    %c0_i32_25 = arith.constant 0 : i32
    %46 = tpu.memref_slice %arg2[%45, %c0_i32_25] : memref<30x32xf32, #tpu.memory_space<any>> -> memref<1x32xf32, #tpu.memory_space<any>>
    %c6_i32_26 = arith.constant 6 : i32
    %c0_i32_27 = arith.constant 0 : i32
    %47 = tpu.memref_slice %arg3[%c6_i32_26, %c0_i32_27] : memref<16x32xf32, #tpu.memory_space<vmem>> -> memref<1x32xf32, #tpu.memory_space<vmem>>
    %48 = tpu.memref_slice %arg4[%c6_i32_24] : memref<32x!tpu.dma_semaphore, #tpu.memory_space<semaphore_mem>> -> memref<1x!tpu.dma_semaphore, #tpu.memory_space<semaphore_mem>>
    %49 = tpu.memref_squeeze %48 : memref<1x!tpu.dma_semaphore, #tpu.memory_space<semaphore_mem>> -> memref<!tpu.dma_semaphore, #tpu.memory_space<semaphore_mem>>
    tpu.enqueue_dma source(%46 : memref<1x32xf32, #tpu.memory_space<any>>) target(%47 : memref<1x32xf32, #tpu.memory_space<vmem>>) target_semaphore(%49 : memref<!tpu.dma_semaphore, #tpu.memory_space<semaphore_mem>>)
    %c7_i32 = arith.constant 7 : i32
    %50 = arith.addi %0, %c7_i32 : i32
    %51 = arith.index_cast %50 : i32 to index
    %52 = memref.load %arg1[%51] : memref<16xi32, #tpu.memory_space<smem>>
    %c7_i32_28 = arith.constant 7 : i32
    %c0_i32_29 = arith.constant 0 : i32
    %53 = tpu.memref_slice %arg2[%52, %c0_i32_29] : memref<30x32xf32, #tpu.memory_space<any>> -> memref<1x32xf32, #tpu.memory_space<any>>
    %c7_i32_30 = arith.constant 7 : i32
    %c0_i32_31 = arith.constant 0 : i32
    %54 = tpu.memref_slice %arg3[%c7_i32_30, %c0_i32_31] : memref<16x32xf32, #tpu.memory_space<vmem>> -> memref<1x32xf32, #tpu.memory_space<vmem>>
    %55 = tpu.memref_slice %arg4[%c7_i32_28] : memref<32x!tpu.dma_semaphore, #tpu.memory_space<semaphore_mem>> -> memref<1x!tpu.dma_semaphore, #tpu.memory_space<semaphore_mem>>
    %56 = tpu.memref_squeeze %55 : memref<1x!tpu.dma_semaphore, #tpu.memory_space<semaphore_mem>> -> memref<!tpu.dma_semaphore, #tpu.memory_space<semaphore_mem>>
    tpu.enqueue_dma source(%53 : memref<1x32xf32, #tpu.memory_space<any>>) target(%54 : memref<1x32xf32, #tpu.memory_space<vmem>>) target_semaphore(%56 : memref<!tpu.dma_semaphore, #tpu.memory_space<semaphore_mem>>)
    %c8_i32 = arith.constant 8 : i32
    %57 = arith.addi %0, %c8_i32 : i32
    %58 = arith.index_cast %57 : i32 to index
    %59 = memref.load %arg1[%58] : memref<16xi32, #tpu.memory_space<smem>>
    %c8_i32_32 = arith.constant 8 : i32
    %c0_i32_33 = arith.constant 0 : i32
    %60 = tpu.memref_slice %arg2[%59, %c0_i32_33] : memref<30x32xf32, #tpu.memory_space<any>> -> memref<1x32xf32, #tpu.memory_space<any>>
    %c8_i32_34 = arith.constant 8 : i32
    %c0_i32_35 = arith.constant 0 : i32
    %61 = tpu.memref_slice %arg3[%c8_i32_34, %c0_i32_35] : memref<16x32xf32, #tpu.memory_space<vmem>> -> memref<1x32xf32, #tpu.memory_space<vmem>>
    %62 = tpu.memref_slice %arg4[%c8_i32_32] : memref<32x!tpu.dma_semaphore, #tpu.memory_space<semaphore_mem>> -> memref<1x!tpu.dma_semaphore, #tpu.memory_space<semaphore_mem>>
    %63 = tpu.memref_squeeze %62 : memref<1x!tpu.dma_semaphore, #tpu.memory_space<semaphore_mem>> -> memref<!tpu.dma_semaphore, #tpu.memory_space<semaphore_mem>>
    tpu.enqueue_dma source(%60 : memref<1x32xf32, #tpu.memory_space<any>>) target(%61 : memref<1x32xf32, #tpu.memory_space<vmem>>) target_semaphore(%63 : memref<!tpu.dma_semaphore, #tpu.memory_space<semaphore_mem>>)
    %c9_i32 = arith.constant 9 : i32
    %64 = arith.addi %0, %c9_i32 : i32
    %65 = arith.index_cast %64 : i32 to index
    %66 = memref.load %arg1[%65] : memref<16xi32, #tpu.memory_space<smem>>
    %c9_i32_36 = arith.constant 9 : i32
    %c0_i32_37 = arith.constant 0 : i32
    %67 = tpu.memref_slice %arg2[%66, %c0_i32_37] : memref<30x32xf32, #tpu.memory_space<any>> -> memref<1x32xf32, #tpu.memory_space<any>>
    %c9_i32_38 = arith.constant 9 : i32
    %c0_i32_39 = arith.constant 0 : i32
    %68 = tpu.memref_slice %arg3[%c9_i32_38, %c0_i32_39] : memref<16x32xf32, #tpu.memory_space<vmem>> -> memref<1x32xf32, #tpu.memory_space<vmem>>
    %69 = tpu.memref_slice %arg4[%c9_i32_36] : memref<32x!tpu.dma_semaphore, #tpu.memory_space<semaphore_mem>> -> memref<1x!tpu.dma_semaphore, #tpu.memory_space<semaphore_mem>>
    %70 = tpu.memref_squeeze %69 : memref<1x!tpu.dma_semaphore, #tpu.memory_space<semaphore_mem>> -> memref<!tpu.dma_semaphore, #tpu.memory_space<semaphore_mem>>
    tpu.enqueue_dma source(%67 : memref<1x32xf32, #tpu.memory_space<any>>) target(%68 : memref<1x32xf32, #tpu.memory_space<vmem>>) target_semaphore(%70 : memref<!tpu.dma_semaphore, #tpu.memory_space<semaphore_mem>>)
    %c10_i32 = arith.constant 10 : i32
    %71 = arith.addi %0, %c10_i32 : i32
    %72 = arith.index_cast %71 : i32 to index
    %73 = memref.load %arg1[%72] : memref<16xi32, #tpu.memory_space<smem>>
    %c10_i32_40 = arith.constant 10 : i32
    %c0_i32_41 = arith.constant 0 : i32
    %74 = tpu.memref_slice %arg2[%73, %c0_i32_41] : memref<30x32xf32, #tpu.memory_space<any>> -> memref<1x32xf32, #tpu.memory_space<any>>
    %c10_i32_42 = arith.constant 10 : i32
    %c0_i32_43 = arith.constant 0 : i32
    %75 = tpu.memref_slice %arg3[%c10_i32_42, %c0_i32_43] : memref<16x32xf32, #tpu.memory_space<vmem>> -> memref<1x32xf32, #tpu.memory_space<vmem>>
    %76 = tpu.memref_slice %arg4[%c10_i32_40] : memref<32x!tpu.dma_semaphore, #tpu.memory_space<semaphore_mem>> -> memref<1x!tpu.dma_semaphore, #tpu.memory_space<semaphore_mem>>
    %77 = tpu.memref_squeeze %76 : memref<1x!tpu.dma_semaphore, #tpu.memory_space<semaphore_mem>> -> memref<!tpu.dma_semaphore, #tpu.memory_space<semaphore_mem>>
    tpu.enqueue_dma source(%74 : memref<1x32xf32, #tpu.memory_space<any>>) target(%75 : memref<1x32xf32, #tpu.memory_space<vmem>>) target_semaphore(%77 : memref<!tpu.dma_semaphore, #tpu.memory_space<semaphore_mem>>)
    %c11_i32 = arith.constant 11 : i32
    %78 = arith.addi %0, %c11_i32 : i32
    %79 = arith.index_cast %78 : i32 to index
    %80 = memref.load %arg1[%79] : memref<16xi32, #tpu.memory_space<smem>>
    %c11_i32_44 = arith.constant 11 : i32
    %c0_i32_45 = arith.constant 0 : i32
    %81 = tpu.memref_slice %arg2[%80, %c0_i32_45] : memref<30x32xf32, #tpu.memory_space<any>> -> memref<1x32xf32, #tpu.memory_space<any>>
    %c11_i32_46 = arith.constant 11 : i32
    %c0_i32_47 = arith.constant 0 : i32
    %82 = tpu.memref_slice %arg3[%c11_i32_46, %c0_i32_47] : memref<16x32xf32, #tpu.memory_space<vmem>> -> memref<1x32xf32, #tpu.memory_space<vmem>>
    %83 = tpu.memref_slice %arg4[%c11_i32_44] : memref<32x!tpu.dma_semaphore, #tpu.memory_space<semaphore_mem>> -> memref<1x!tpu.dma_semaphore, #tpu.memory_space<semaphore_mem>>
    %84 = tpu.memref_squeeze %83 : memref<1x!tpu.dma_semaphore, #tpu.memory_space<semaphore_mem>> -> memref<!tpu.dma_semaphore, #tpu.memory_space<semaphore_mem>>
    tpu.enqueue_dma source(%81 : memref<1x32xf32, #tpu.memory_space<any>>) target(%82 : memref<1x32xf32, #tpu.memory_space<vmem>>) target_semaphore(%84 : memref<!tpu.dma_semaphore, #tpu.memory_space<semaphore_mem>>)
    %c12_i32 = arith.constant 12 : i32
    %85 = arith.addi %0, %c12_i32 : i32
    %86 = arith.index_cast %85 : i32 to index
    %87 = memref.load %arg1[%86] : memref<16xi32, #tpu.memory_space<smem>>
    %c12_i32_48 = arith.constant 12 : i32
    %c0_i32_49 = arith.constant 0 : i32
    %88 = tpu.memref_slice %arg2[%87, %c0_i32_49] : memref<30x32xf32, #tpu.memory_space<any>> -> memref<1x32xf32, #tpu.memory_space<any>>
    %c12_i32_50 = arith.constant 12 : i32
    %c0_i32_51 = arith.constant 0 : i32
    %89 = tpu.memref_slice %arg3[%c12_i32_50, %c0_i32_51] : memref<16x32xf32, #tpu.memory_space<vmem>> -> memref<1x32xf32, #tpu.memory_space<vmem>>
    %90 = tpu.memref_slice %arg4[%c12_i32_48] : memref<32x!tpu.dma_semaphore, #tpu.memory_space<semaphore_mem>> -> memref<1x!tpu.dma_semaphore, #tpu.memory_space<semaphore_mem>>
    %91 = tpu.memref_squeeze %90 : memref<1x!tpu.dma_semaphore, #tpu.memory_space<semaphore_mem>> -> memref<!tpu.dma_semaphore, #tpu.memory_space<semaphore_mem>>
    tpu.enqueue_dma source(%88 : memref<1x32xf32, #tpu.memory_space<any>>) target(%89 : memref<1x32xf32, #tpu.memory_space<vmem>>) target_semaphore(%91 : memref<!tpu.dma_semaphore, #tpu.memory_space<semaphore_mem>>)
    %c13_i32 = arith.constant 13 : i32
    %92 = arith.addi %0, %c13_i32 : i32
    %93 = arith.index_cast %92 : i32 to index
    %94 = memref.load %arg1[%93] : memref<16xi32, #tpu.memory_space<smem>>
    %c13_i32_52 = arith.constant 13 : i32
    %c0_i32_53 = arith.constant 0 : i32
    %95 = tpu.memref_slice %arg2[%94, %c0_i32_53] : memref<30x32xf32, #tpu.memory_space<any>> -> memref<1x32xf32, #tpu.memory_space<any>>
    %c13_i32_54 = arith.constant 13 : i32
    %c0_i32_55 = arith.constant 0 : i32
    %96 = tpu.memref_slice %arg3[%c13_i32_54, %c0_i32_55] : memref<16x32xf32, #tpu.memory_space<vmem>> -> memref<1x32xf32, #tpu.memory_space<vmem>>
    %97 = tpu.memref_slice %arg4[%c13_i32_52] : memref<32x!tpu.dma_semaphore, #tpu.memory_space<semaphore_mem>> -> memref<1x!tpu.dma_semaphore, #tpu.memory_space<semaphore_mem>>
    %98 = tpu.memref_squeeze %97 : memref<1x!tpu.dma_semaphore, #tpu.memory_space<semaphore_mem>> -> memref<!tpu.dma_semaphore, #tpu.memory_space<semaphore_mem>>
    tpu.enqueue_dma source(%95 : memref<1x32xf32, #tpu.memory_space<any>>) target(%96 : memref<1x32xf32, #tpu.memory_space<vmem>>) target_semaphore(%98 : memref<!tpu.dma_semaphore, #tpu.memory_space<semaphore_mem>>)
    %c14_i32 = arith.constant 14 : i32
    %99 = arith.addi %0, %c14_i32 : i32
    %100 = arith.index_cast %99 : i32 to index
    %101 = memref.load %arg1[%100] : memref<16xi32, #tpu.memory_space<smem>>
    %c14_i32_56 = arith.constant 14 : i32
    %c0_i32_57 = arith.constant 0 : i32
    %102 = tpu.memref_slice %arg2[%101, %c0_i32_57] : memref<30x32xf32, #tpu.memory_space<any>> -> memref<1x32xf32, #tpu.memory_space<any>>
    %c14_i32_58 = arith.constant 14 : i32
    %c0_i32_59 = arith.constant 0 : i32
    %103 = tpu.memref_slice %arg3[%c14_i32_58, %c0_i32_59] : memref<16x32xf32, #tpu.memory_space<vmem>> -> memref<1x32xf32, #tpu.memory_space<vmem>>
    %104 = tpu.memref_slice %arg4[%c14_i32_56] : memref<32x!tpu.dma_semaphore, #tpu.memory_space<semaphore_mem>> -> memref<1x!tpu.dma_semaphore, #tpu.memory_space<semaphore_mem>>
    %105 = tpu.memref_squeeze %104 : memref<1x!tpu.dma_semaphore, #tpu.memory_space<semaphore_mem>> -> memref<!tpu.dma_semaphore, #tpu.memory_space<semaphore_mem>>
    tpu.enqueue_dma source(%102 : memref<1x32xf32, #tpu.memory_space<any>>) target(%103 : memref<1x32xf32, #tpu.memory_space<vmem>>) target_semaphore(%105 : memref<!tpu.dma_semaphore, #tpu.memory_space<semaphore_mem>>)
    %c15_i32 = arith.constant 15 : i32
    %106 = arith.addi %0, %c15_i32 : i32
    %107 = arith.index_cast %106 : i32 to index
    %108 = memref.load %arg1[%107] : memref<16xi32, #tpu.memory_space<smem>>
    %c15_i32_60 = arith.constant 15 : i32
    %c0_i32_61 = arith.constant 0 : i32
    %109 = tpu.memref_slice %arg2[%108, %c0_i32_61] : memref<30x32xf32, #tpu.memory_space<any>> -> memref<1x32xf32, #tpu.memory_space<any>>
    %c15_i32_62 = arith.constant 15 : i32
    %c0_i32_63 = arith.constant 0 : i32
    %110 = tpu.memref_slice %arg3[%c15_i32_62, %c0_i32_63] : memref<16x32xf32, #tpu.memory_space<vmem>> -> memref<1x32xf32, #tpu.memory_space<vmem>>
    %111 = tpu.memref_slice %arg4[%c15_i32_60] : memref<32x!tpu.dma_semaphore, #tpu.memory_space<semaphore_mem>> -> memref<1x!tpu.dma_semaphore, #tpu.memory_space<semaphore_mem>>
    %112 = tpu.memref_squeeze %111 : memref<1x!tpu.dma_semaphore, #tpu.memory_space<semaphore_mem>> -> memref<!tpu.dma_semaphore, #tpu.memory_space<semaphore_mem>>
    tpu.enqueue_dma source(%109 : memref<1x32xf32, #tpu.memory_space<any>>) target(%110 : memref<1x32xf32, #tpu.memory_space<vmem>>) target_semaphore(%112 : memref<!tpu.dma_semaphore, #tpu.memory_space<semaphore_mem>>)
    %c0_i32_64 = arith.constant 0 : i32
    %c0_i32_65 = arith.constant 0 : i32
    %113 = tpu.memref_slice %arg2[%3, %c0_i32_65] : memref<30x32xf32, #tpu.memory_space<any>> -> memref<1x32xf32, #tpu.memory_space<any>>
    %c0_i32_66 = arith.constant 0 : i32
    %c0_i32_67 = arith.constant 0 : i32
    %114 = tpu.memref_slice %arg3[%c0_i32_66, %c0_i32_67] : memref<16x32xf32, #tpu.memory_space<vmem>> -> memref<1x32xf32, #tpu.memory_space<vmem>>
    %115 = tpu.memref_slice %arg4[%c0_i32_64] : memref<32x!tpu.dma_semaphore, #tpu.memory_space<semaphore_mem>> -> memref<1x!tpu.dma_semaphore, #tpu.memory_space<semaphore_mem>>
    %116 = tpu.memref_squeeze %115 : memref<1x!tpu.dma_semaphore, #tpu.memory_space<semaphore_mem>> -> memref<!tpu.dma_semaphore, #tpu.memory_space<semaphore_mem>>
    tpu.wait_dma2 semaphore(%116 : memref<!tpu.dma_semaphore, #tpu.memory_space<semaphore_mem>>) src(%113 : memref<1x32xf32, #tpu.memory_space<any>>) dst(%114 : memref<1x32xf32, #tpu.memory_space<vmem>>)
    %c1_i32_68 = arith.constant 1 : i32
    %c0_i32_69 = arith.constant 0 : i32
    %117 = tpu.memref_slice %arg2[%10, %c0_i32_69] : memref<30x32xf32, #tpu.memory_space<any>> -> memref<1x32xf32, #tpu.memory_space<any>>
    %c1_i32_70 = arith.constant 1 : i32
    %c0_i32_71 = arith.constant 0 : i32
    %118 = tpu.memref_slice %arg3[%c1_i32_70, %c0_i32_71] : memref<16x32xf32, #tpu.memory_space<vmem>> -> memref<1x32xf32, #tpu.memory_space<vmem>>
    %119 = tpu.memref_slice %arg4[%c1_i32_68] : memref<32x!tpu.dma_semaphore, #tpu.memory_space<semaphore_mem>> -> memref<1x!tpu.dma_semaphore, #tpu.memory_space<semaphore_mem>>
    %120 = tpu.memref_squeeze %119 : memref<1x!tpu.dma_semaphore, #tpu.memory_space<semaphore_mem>> -> memref<!tpu.dma_semaphore, #tpu.memory_space<semaphore_mem>>
    tpu.wait_dma2 semaphore(%120 : memref<!tpu.dma_semaphore, #tpu.memory_space<semaphore_mem>>) src(%117 : memref<1x32xf32, #tpu.memory_space<any>>) dst(%118 : memref<1x32xf32, #tpu.memory_space<vmem>>)
    %c2_i32_72 = arith.constant 2 : i32
    %c0_i32_73 = arith.constant 0 : i32
    %121 = tpu.memref_slice %arg2[%17, %c0_i32_73] : memref<30x32xf32, #tpu.memory_space<any>> -> memref<1x32xf32, #tpu.memory_space<any>>
    %c2_i32_74 = arith.constant 2 : i32
    %c0_i32_75 = arith.constant 0 : i32
    %122 = tpu.memref_slice %arg3[%c2_i32_74, %c0_i32_75] : memref<16x32xf32, #tpu.memory_space<vmem>> -> memref<1x32xf32, #tpu.memory_space<vmem>>
    %123 = tpu.memref_slice %arg4[%c2_i32_72] : memref<32x!tpu.dma_semaphore, #tpu.memory_space<semaphore_mem>> -> memref<1x!tpu.dma_semaphore, #tpu.memory_space<semaphore_mem>>
    %124 = tpu.memref_squeeze %123 : memref<1x!tpu.dma_semaphore, #tpu.memory_space<semaphore_mem>> -> memref<!tpu.dma_semaphore, #tpu.memory_space<semaphore_mem>>
    tpu.wait_dma2 semaphore(%124 : memref<!tpu.dma_semaphore, #tpu.memory_space<semaphore_mem>>) src(%121 : memref<1x32xf32, #tpu.memory_space<any>>) dst(%122 : memref<1x32xf32, #tpu.memory_space<vmem>>)
    %c3_i32_76 = arith.constant 3 : i32
    %c0_i32_77 = arith.constant 0 : i32
    %125 = tpu.memref_slice %arg2[%24, %c0_i32_77] : memref<30x32xf32, #tpu.memory_space<any>> -> memref<1x32xf32, #tpu.memory_space<any>>
    %c3_i32_78 = arith.constant 3 : i32
    %c0_i32_79 = arith.constant 0 : i32
    %126 = tpu.memref_slice %arg3[%c3_i32_78, %c0_i32_79] : memref<16x32xf32, #tpu.memory_space<vmem>> -> memref<1x32xf32, #tpu.memory_space<vmem>>
    %127 = tpu.memref_slice %arg4[%c3_i32_76] : memref<32x!tpu.dma_semaphore, #tpu.memory_space<semaphore_mem>> -> memref<1x!tpu.dma_semaphore, #tpu.memory_space<semaphore_mem>>
    %128 = tpu.memref_squeeze %127 : memref<1x!tpu.dma_semaphore, #tpu.memory_space<semaphore_mem>> -> memref<!tpu.dma_semaphore, #tpu.memory_space<semaphore_mem>>
    tpu.wait_dma2 semaphore(%128 : memref<!tpu.dma_semaphore, #tpu.memory_space<semaphore_mem>>) src(%125 : memref<1x32xf32, #tpu.memory_space<any>>) dst(%126 : memref<1x32xf32, #tpu.memory_space<vmem>>)
    %c4_i32_80 = arith.constant 4 : i32
    %c0_i32_81 = arith.constant 0 : i32
    %129 = tpu.memref_slice %arg2[%31, %c0_i32_81] : memref<30x32xf32, #tpu.memory_space<any>> -> memref<1x32xf32, #tpu.memory_space<any>>
    %c4_i32_82 = arith.constant 4 : i32
    %c0_i32_83 = arith.constant 0 : i32
    %130 = tpu.memref_slice %arg3[%c4_i32_82, %c0_i32_83] : memref<16x32xf32, #tpu.memory_space<vmem>> -> memref<1x32xf32, #tpu.memory_space<vmem>>
    %131 = tpu.memref_slice %arg4[%c4_i32_80] : memref<32x!tpu.dma_semaphore, #tpu.memory_space<semaphore_mem>> -> memref<1x!tpu.dma_semaphore, #tpu.memory_space<semaphore_mem>>
    %132 = tpu.memref_squeeze %131 : memref<1x!tpu.dma_semaphore, #tpu.memory_space<semaphore_mem>> -> memref<!tpu.dma_semaphore, #tpu.memory_space<semaphore_mem>>
    tpu.wait_dma2 semaphore(%132 : memref<!tpu.dma_semaphore, #tpu.memory_space<semaphore_mem>>) src(%129 : memref<1x32xf32, #tpu.memory_space<any>>) dst(%130 : memref<1x32xf32, #tpu.memory_space<vmem>>)
    %c5_i32_84 = arith.constant 5 : i32
    %c0_i32_85 = arith.constant 0 : i32
    %133 = tpu.memref_slice %arg2[%38, %c0_i32_85] : memref<30x32xf32, #tpu.memory_space<any>> -> memref<1x32xf32, #tpu.memory_space<any>>
    %c5_i32_86 = arith.constant 5 : i32
    %c0_i32_87 = arith.constant 0 : i32
    %134 = tpu.memref_slice %arg3[%c5_i32_86, %c0_i32_87] : memref<16x32xf32, #tpu.memory_space<vmem>> -> memref<1x32xf32, #tpu.memory_space<vmem>>
    %135 = tpu.memref_slice %arg4[%c5_i32_84] : memref<32x!tpu.dma_semaphore, #tpu.memory_space<semaphore_mem>> -> memref<1x!tpu.dma_semaphore, #tpu.memory_space<semaphore_mem>>
    %136 = tpu.memref_squeeze %135 : memref<1x!tpu.dma_semaphore, #tpu.memory_space<semaphore_mem>> -> memref<!tpu.dma_semaphore, #tpu.memory_space<semaphore_mem>>
    tpu.wait_dma2 semaphore(%136 : memref<!tpu.dma_semaphore, #tpu.memory_space<semaphore_mem>>) src(%133 : memref<1x32xf32, #tpu.memory_space<any>>) dst(%134 : memref<1x32xf32, #tpu.memory_space<vmem>>)
    %c6_i32_88 = arith.constant 6 : i32
    %c0_i32_89 = arith.constant 0 : i32
    %137 = tpu.memref_slice %arg2[%45, %c0_i32_89] : memref<30x32xf32, #tpu.memory_space<any>> -> memref<1x32xf32, #tpu.memory_space<any>>
    %c6_i32_90 = arith.constant 6 : i32
    %c0_i32_91 = arith.constant 0 : i32
    %138 = tpu.memref_slice %arg3[%c6_i32_90, %c0_i32_91] : memref<16x32xf32, #tpu.memory_space<vmem>> -> memref<1x32xf32, #tpu.memory_space<vmem>>
    %139 = tpu.memref_slice %arg4[%c6_i32_88] : memref<32x!tpu.dma_semaphore, #tpu.memory_space<semaphore_mem>> -> memref<1x!tpu.dma_semaphore, #tpu.memory_space<semaphore_mem>>
    %140 = tpu.memref_squeeze %139 : memref<1x!tpu.dma_semaphore, #tpu.memory_space<semaphore_mem>> -> memref<!tpu.dma_semaphore, #tpu.memory_space<semaphore_mem>>
    tpu.wait_dma2 semaphore(%140 : memref<!tpu.dma_semaphore, #tpu.memory_space<semaphore_mem>>) src(%137 : memref<1x32xf32, #tpu.memory_space<any>>) dst(%138 : memref<1x32xf32, #tpu.memory_space<vmem>>)
    %c7_i32_92 = arith.constant 7 : i32
    %c0_i32_93 = arith.constant 0 : i32
    %141 = tpu.memref_slice %arg2[%52, %c0_i32_93] : memref<30x32xf32, #tpu.memory_space<any>> -> memref<1x32xf32, #tpu.memory_space<any>>
    %c7_i32_94 = arith.constant 7 : i32
    %c0_i32_95 = arith.constant 0 : i32
    %142 = tpu.memref_slice %arg3[%c7_i32_94, %c0_i32_95] : memref<16x32xf32, #tpu.memory_space<vmem>> -> memref<1x32xf32, #tpu.memory_space<vmem>>
    %143 = tpu.memref_slice %arg4[%c7_i32_92] : memref<32x!tpu.dma_semaphore, #tpu.memory_space<semaphore_mem>> -> memref<1x!tpu.dma_semaphore, #tpu.memory_space<semaphore_mem>>
    %144 = tpu.memref_squeeze %143 : memref<1x!tpu.dma_semaphore, #tpu.memory_space<semaphore_mem>> -> memref<!tpu.dma_semaphore, #tpu.memory_space<semaphore_mem>>
    tpu.wait_dma2 semaphore(%144 : memref<!tpu.dma_semaphore, #tpu.memory_space<semaphore_mem>>) src(%141 : memref<1x32xf32, #tpu.memory_space<any>>) dst(%142 : memref<1x32xf32, #tpu.memory_space<vmem>>)
    %c8_i32_96 = arith.constant 8 : i32
    %c0_i32_97 = arith.constant 0 : i32
    %145 = tpu.memref_slice %arg2[%59, %c0_i32_97] : memref<30x32xf32, #tpu.memory_space<any>> -> memref<1x32xf32, #tpu.memory_space<any>>
    %c8_i32_98 = arith.constant 8 : i32
    %c0_i32_99 = arith.constant 0 : i32
    %146 = tpu.memref_slice %arg3[%c8_i32_98, %c0_i32_99] : memref<16x32xf32, #tpu.memory_space<vmem>> -> memref<1x32xf32, #tpu.memory_space<vmem>>
    %147 = tpu.memref_slice %arg4[%c8_i32_96] : memref<32x!tpu.dma_semaphore, #tpu.memory_space<semaphore_mem>> -> memref<1x!tpu.dma_semaphore, #tpu.memory_space<semaphore_mem>>
    %148 = tpu.memref_squeeze %147 : memref<1x!tpu.dma_semaphore, #tpu.memory_space<semaphore_mem>> -> memref<!tpu.dma_semaphore, #tpu.memory_space<semaphore_mem>>
    tpu.wait_dma2 semaphore(%148 : memref<!tpu.dma_semaphore, #tpu.memory_space<semaphore_mem>>) src(%145 : memref<1x32xf32, #tpu.memory_space<any>>) dst(%146 : memref<1x32xf32, #tpu.memory_space<vmem>>)
    %c9_i32_100 = arith.constant 9 : i32
    %c0_i32_101 = arith.constant 0 : i32
    %149 = tpu.memref_slice %arg2[%66, %c0_i32_101] : memref<30x32xf32, #tpu.memory_space<any>> -> memref<1x32xf32, #tpu.memory_space<any>>
    %c9_i32_102 = arith.constant 9 : i32
    %c0_i32_103 = arith.constant 0 : i32
    %150 = tpu.memref_slice %arg3[%c9_i32_102, %c0_i32_103] : memref<16x32xf32, #tpu.memory_space<vmem>> -> memref<1x32xf32, #tpu.memory_space<vmem>>
    %151 = tpu.memref_slice %arg4[%c9_i32_100] : memref<32x!tpu.dma_semaphore, #tpu.memory_space<semaphore_mem>> -> memref<1x!tpu.dma_semaphore, #tpu.memory_space<semaphore_mem>>
    %152 = tpu.memref_squeeze %151 : memref<1x!tpu.dma_semaphore, #tpu.memory_space<semaphore_mem>> -> memref<!tpu.dma_semaphore, #tpu.memory_space<semaphore_mem>>
    tpu.wait_dma2 semaphore(%152 : memref<!tpu.dma_semaphore, #tpu.memory_space<semaphore_mem>>) src(%149 : memref<1x32xf32, #tpu.memory_space<any>>) dst(%150 : memref<1x32xf32, #tpu.memory_space<vmem>>)
    %c10_i32_104 = arith.constant 10 : i32
    %c0_i32_105 = arith.constant 0 : i32
    %153 = tpu.memref_slice %arg2[%73, %c0_i32_105] : memref<30x32xf32, #tpu.memory_space<any>> -> memref<1x32xf32, #tpu.memory_space<any>>
    %c10_i32_106 = arith.constant 10 : i32
    %c0_i32_107 = arith.constant 0 : i32
    %154 = tpu.memref_slice %arg3[%c10_i32_106, %c0_i32_107] : memref<16x32xf32, #tpu.memory_space<vmem>> -> memref<1x32xf32, #tpu.memory_space<vmem>>
    %155 = tpu.memref_slice %arg4[%c10_i32_104] : memref<32x!tpu.dma_semaphore, #tpu.memory_space<semaphore_mem>> -> memref<1x!tpu.dma_semaphore, #tpu.memory_space<semaphore_mem>>
    %156 = tpu.memref_squeeze %155 : memref<1x!tpu.dma_semaphore, #tpu.memory_space<semaphore_mem>> -> memref<!tpu.dma_semaphore, #tpu.memory_space<semaphore_mem>>
    tpu.wait_dma2 semaphore(%156 : memref<!tpu.dma_semaphore, #tpu.memory_space<semaphore_mem>>) src(%153 : memref<1x32xf32, #tpu.memory_space<any>>) dst(%154 : memref<1x32xf32, #tpu.memory_space<vmem>>)
    %c11_i32_108 = arith.constant 11 : i32
    %c0_i32_109 = arith.constant 0 : i32
    %157 = tpu.memref_slice %arg2[%80, %c0_i32_109] : memref<30x32xf32, #tpu.memory_space<any>> -> memref<1x32xf32, #tpu.memory_space<any>>
    %c11_i32_110 = arith.constant 11 : i32
    %c0_i32_111 = arith.constant 0 : i32
    %158 = tpu.memref_slice %arg3[%c11_i32_110, %c0_i32_111] : memref<16x32xf32, #tpu.memory_space<vmem>> -> memref<1x32xf32, #tpu.memory_space<vmem>>
    %159 = tpu.memref_slice %arg4[%c11_i32_108] : memref<32x!tpu.dma_semaphore, #tpu.memory_space<semaphore_mem>> -> memref<1x!tpu.dma_semaphore, #tpu.memory_space<semaphore_mem>>
    %160 = tpu.memref_squeeze %159 : memref<1x!tpu.dma_semaphore, #tpu.memory_space<semaphore_mem>> -> memref<!tpu.dma_semaphore, #tpu.memory_space<semaphore_mem>>
    tpu.wait_dma2 semaphore(%160 : memref<!tpu.dma_semaphore, #tpu.memory_space<semaphore_mem>>) src(%157 : memref<1x32xf32, #tpu.memory_space<any>>) dst(%158 : memref<1x32xf32, #tpu.memory_space<vmem>>)
    %c12_i32_112 = arith.constant 12 : i32
    %c0_i32_113 = arith.constant 0 : i32
    %161 = tpu.memref_slice %arg2[%87, %c0_i32_113] : memref<30x32xf32, #tpu.memory_space<any>> -> memref<1x32xf32, #tpu.memory_space<any>>
    %c12_i32_114 = arith.constant 12 : i32
    %c0_i32_115 = arith.constant 0 : i32
    %162 = tpu.memref_slice %arg3[%c12_i32_114, %c0_i32_115] : memref<16x32xf32, #tpu.memory_space<vmem>> -> memref<1x32xf32, #tpu.memory_space<vmem>>
    %163 = tpu.memref_slice %arg4[%c12_i32_112] : memref<32x!tpu.dma_semaphore, #tpu.memory_space<semaphore_mem>> -> memref<1x!tpu.dma_semaphore, #tpu.memory_space<semaphore_mem>>
    %164 = tpu.memref_squeeze %163 : memref<1x!tpu.dma_semaphore, #tpu.memory_space<semaphore_mem>> -> memref<!tpu.dma_semaphore, #tpu.memory_space<semaphore_mem>>
    tpu.wait_dma2 semaphore(%164 : memref<!tpu.dma_semaphore, #tpu.memory_space<semaphore_mem>>) src(%161 : memref<1x32xf32, #tpu.memory_space<any>>) dst(%162 : memref<1x32xf32, #tpu.memory_space<vmem>>)
    %c13_i32_116 = arith.constant 13 : i32
    %c0_i32_117 = arith.constant 0 : i32
    %165 = tpu.memref_slice %arg2[%94, %c0_i32_117] : memref<30x32xf32, #tpu.memory_space<any>> -> memref<1x32xf32, #tpu.memory_space<any>>
    %c13_i32_118 = arith.constant 13 : i32
    %c0_i32_119 = arith.constant 0 : i32
    %166 = tpu.memref_slice %arg3[%c13_i32_118, %c0_i32_119] : memref<16x32xf32, #tpu.memory_space<vmem>> -> memref<1x32xf32, #tpu.memory_space<vmem>>
    %167 = tpu.memref_slice %arg4[%c13_i32_116] : memref<32x!tpu.dma_semaphore, #tpu.memory_space<semaphore_mem>> -> memref<1x!tpu.dma_semaphore, #tpu.memory_space<semaphore_mem>>
    %168 = tpu.memref_squeeze %167 : memref<1x!tpu.dma_semaphore, #tpu.memory_space<semaphore_mem>> -> memref<!tpu.dma_semaphore, #tpu.memory_space<semaphore_mem>>
    tpu.wait_dma2 semaphore(%168 : memref<!tpu.dma_semaphore, #tpu.memory_space<semaphore_mem>>) src(%165 : memref<1x32xf32, #tpu.memory_space<any>>) dst(%166 : memref<1x32xf32, #tpu.memory_space<vmem>>)
    %c14_i32_120 = arith.constant 14 : i32
    %c0_i32_121 = arith.constant 0 : i32
    %169 = tpu.memref_slice %arg2[%101, %c0_i32_121] : memref<30x32xf32, #tpu.memory_space<any>> -> memref<1x32xf32, #tpu.memory_space<any>>
    %c14_i32_122 = arith.constant 14 : i32
    %c0_i32_123 = arith.constant 0 : i32
    %170 = tpu.memref_slice %arg3[%c14_i32_122, %c0_i32_123] : memref<16x32xf32, #tpu.memory_space<vmem>> -> memref<1x32xf32, #tpu.memory_space<vmem>>
    %171 = tpu.memref_slice %arg4[%c14_i32_120] : memref<32x!tpu.dma_semaphore, #tpu.memory_space<semaphore_mem>> -> memref<1x!tpu.dma_semaphore, #tpu.memory_space<semaphore_mem>>
    %172 = tpu.memref_squeeze %171 : memref<1x!tpu.dma_semaphore, #tpu.memory_space<semaphore_mem>> -> memref<!tpu.dma_semaphore, #tpu.memory_space<semaphore_mem>>
    tpu.wait_dma2 semaphore(%172 : memref<!tpu.dma_semaphore, #tpu.memory_space<semaphore_mem>>) src(%169 : memref<1x32xf32, #tpu.memory_space<any>>) dst(%170 : memref<1x32xf32, #tpu.memory_space<vmem>>)
    %c15_i32_124 = arith.constant 15 : i32
    %c0_i32_125 = arith.constant 0 : i32
    %173 = tpu.memref_slice %arg2[%108, %c0_i32_125] : memref<30x32xf32, #tpu.memory_space<any>> -> memref<1x32xf32, #tpu.memory_space<any>>
    %c15_i32_126 = arith.constant 15 : i32
    %c0_i32_127 = arith.constant 0 : i32
    %174 = tpu.memref_slice %arg3[%c15_i32_126, %c0_i32_127] : memref<16x32xf32, #tpu.memory_space<vmem>> -> memref<1x32xf32, #tpu.memory_space<vmem>>
    %175 = tpu.memref_slice %arg4[%c15_i32_124] : memref<32x!tpu.dma_semaphore, #tpu.memory_space<semaphore_mem>> -> memref<1x!tpu.dma_semaphore, #tpu.memory_space<semaphore_mem>>
    %176 = tpu.memref_squeeze %175 : memref<1x!tpu.dma_semaphore, #tpu.memory_space<semaphore_mem>> -> memref<!tpu.dma_semaphore, #tpu.memory_space<semaphore_mem>>
    tpu.wait_dma2 semaphore(%176 : memref<!tpu.dma_semaphore, #tpu.memory_space<semaphore_mem>>) src(%173 : memref<1x32xf32, #tpu.memory_space<any>>) dst(%174 : memref<1x32xf32, #tpu.memory_space<vmem>>)
    return
  }
  func.func @transform_1(%arg0: i32, %arg1: memref<16xi32, #tpu.memory_space<smem>>) -> (i32, i32) {
    %c0_i32 = arith.constant 0 : i32
    %c0_i32_0 = arith.constant 0 : i32
    return %arg0, %c0_i32 : i32, i32
  }
}

</mosaic_0001>

<llo_original>
// kernel: tpu_custom_call.1
$region0: #{tpu_custom_call.1}
  #allocation0 [shape = 'u32[]', space=smem, size = 0x4, offset = 0x4, fixed_abs, tag = 'smem constant byte address 0x4 - core index']
  #allocation1 [shape = 'u32[144,128]{1,0:T(1,128)}', space=vmem, size = 0x12000, scoped, tag = 'internal scratch']
  #allocation2 [shape = 's32[32]{0}', space=sflag, size = 0x80, scoped, tag = 'scratch operand']
  #allocation3 [shape = 's32[1]{0}', space=sflag, size = 0x4, scoped, tag = 'scoped memory for tpu_custom_call.1']
  #allocation4 [shape = 'u8[512]{0}', space=smem, size = 0x200, scoped, tag = 'prefetched SMEM operand 0']
  #allocation7 [shape = 's32[]', space=sflag, size = 0x4, offset = 0, fixed_abs, tag = 'sflag constant byte address 0x0 - dummy sync flag']
  #allocation8 [shape = 's32[]', space=sflag, size = 0x4, offset = 0, fixed_abs, tag = 'sflag constant byte address 0x0 - dummy sync flag']
  #allocation9 [shape = 'u32[]', space=smem, size = 0x4, offset = 0x44, fixed_abs, tag = 'smem constant byte address 0x44 - assertion arg 0']
  #allocation10 [shape = 'u32[]', space=smem, size = 0x4, offset = 0x48, fixed_abs, tag = 'smem constant byte address 0x48 - assertion arg 1']
  #allocation11 [shape = 's32[]', space=sflag, size = 0x4, offset = 0, fixed_abs, tag = 'sflag constant byte address 0x0 - dummy sync flag']
  #allocation12 [shape = 's32[]', space=sflag, size = 0x4, offset = 0, fixed_abs, tag = 'sflag constant byte address 0x0 - dummy sync flag']
  #allocation13 [shape = 's32[]', space=sflag, size = 0x4, offset = 0, fixed_abs, tag = 'sflag constant byte address 0x0 - dummy sync flag']
  #allocation14 [shape = 's32[]', space=sflag, size = 0x4, offset = 0, fixed_abs, tag = 'sflag constant byte address 0x0 - dummy sync flag']
  #allocation15 [shape = 's32[]', space=sflag, size = 0x4, offset = 0, fixed_abs, tag = 'sflag constant byte address 0x0 - dummy sync flag']
  #allocation16 [shape = 's32[]', space=sflag, size = 0x4, offset = 0, fixed_abs, tag = 'sflag constant byte address 0x0 - dummy sync flag']
  #allocation17 [shape = 's32[]', space=sflag, size = 0x4, offset = 0, fixed_abs, tag = 'sflag constant byte address 0x0 - dummy sync flag']
  #allocation18 [shape = 's32[]', space=sflag, size = 0x4, offset = 0, fixed_abs, tag = 'sflag constant byte address 0x0 - dummy sync flag']
  #allocation19 [shape = 's32[]', space=sflag, size = 0x4, offset = 0, fixed_abs, tag = 'sflag constant byte address 0x0 - dummy sync flag']
  #allocation20 [shape = 's32[]', space=sflag, size = 0x4, offset = 0, fixed_abs, tag = 'sflag constant byte address 0x0 - dummy sync flag']
  #allocation21 [shape = 's32[]', space=sflag, size = 0x4, offset = 0, fixed_abs, tag = 'sflag constant byte address 0x0 - dummy sync flag']
  #allocation22 [shape = 's32[]', space=sflag, size = 0x4, offset = 0, fixed_abs, tag = 'sflag constant byte address 0x0 - dummy sync flag']
  #allocation23 [shape = 's32[]', space=sflag, size = 0x4, offset = 0, fixed_abs, tag = 'sflag constant byte address 0x0 - dummy sync flag']
  #allocation24 [shape = 's32[]', space=sflag, size = 0x4, offset = 0, fixed_abs, tag = 'sflag constant byte address 0x0 - dummy sync flag']
  #allocation25 [shape = 's32[]', space=sflag, size = 0x4, offset = 0, fixed_abs, tag = 'sflag constant byte address 0x0 - dummy sync flag']
  #allocation26 [shape = 's32[]', space=sflag, size = 0x4, offset = 0, fixed_abs, tag = 'sflag constant byte address 0x0 - dummy sync flag']
  #allocation27 [shape = 's32[]', space=sflag, size = 0x4, offset = 0, fixed_abs, tag = 'sflag constant byte address 0x0 - dummy sync flag']
  #allocation28 [shape = 's32[]', space=sflag, size = 0x4, offset = 0, fixed_abs, tag = 'sflag constant byte address 0x0 - dummy sync flag']
  #allocation29 [shape = 's32[]', space=sflag, size = 0x4, offset = 0, fixed_abs, tag = 'sflag constant byte address 0x0 - dummy sync flag']
  #allocation30 [shape = 's32[]', space=sflag, size = 0x4, offset = 0, fixed_abs, tag = 'sflag constant byte address 0x0 - dummy sync flag']
  #allocation31 [shape = 's32[]', space=sflag, size = 0x4, offset = 0, fixed_abs, tag = 'sflag constant byte address 0x0 - dummy sync flag']
  #allocation32 [shape = 's32[]', space=sflag, size = 0x4, offset = 0, fixed_abs, tag = 'sflag constant byte address 0x0 - dummy sync flag']
  #allocation33 [shape = 's32[]', space=sflag, size = 0x4, offset = 0, fixed_abs, tag = 'sflag constant byte address 0x0 - dummy sync flag']
  #allocation34 [shape = 's32[]', space=sflag, size = 0x4, offset = 0, fixed_abs, tag = 'sflag constant byte address 0x0 - dummy sync flag']
  #allocation35 [shape = 's32[]', space=sflag, size = 0x4, offset = 0, fixed_abs, tag = 'sflag constant byte address 0x0 - dummy sync flag']
  #allocation36 [shape = 's32[]', space=sflag, size = 0x4, offset = 0, fixed_abs, tag = 'sflag constant byte address 0x0 - dummy sync flag']
  #allocation37 [shape = 's32[]', space=sflag, size = 0x4, offset = 0, fixed_abs, tag = 'sflag constant byte address 0x0 - dummy sync flag']
  #allocation38 [shape = 's32[]', space=sflag, size = 0x4, offset = 0, fixed_abs, tag = 'sflag constant byte address 0x0 - dummy sync flag']
  #allocation39 [shape = 's32[]', space=sflag, size = 0x4, offset = 0, fixed_abs, tag = 'sflag constant byte address 0x0 - dummy sync flag']
  #allocation40 [shape = 's32[]', space=sflag, size = 0x4, offset = 0, fixed_abs, tag = 'sflag constant byte address 0x0 - dummy sync flag']
  %s0 = inlined_call_operand.hbm [shape: s32[16], index: 0, kind: input, shape index: {}]
  %s1 = inlined_call_operand.hbm [shape: f32[30,32], index: 1, kind: input, shape index: {}]
  %s2 = inlined_call_operand.hbm [shape: f32[16,32], index: 2, kind: output, shape index: {}]
  %s3 = sld [smem:[#allocation0]]
  $region74: #{tpu_custom_call.1} parent=0
    _
  %s5 = ssub.s32 1, %s3
  %s6 = scalar_select 0, %s5, %s3
  %8 = dma.hbm_to_smem %s0, 16, [#allocation4], [#allocation3]
  %9 = dma.done [#allocation3], 16
  %10 = sfence
  $region1: #{tpu_custom_call.1} parent=0
    #allocation5 [shape = 'u8[8192]{0}', space=vmem, size = 0x2000, scoped, tag = 'output window, operand 0, single buffered']
    #allocation6 [shape = 's32[1]{0}', space=sflag, size = 0x4, scoped, tag = 'scoped memory for tpu_custom_call.1']
    %11 = vsyncpa [#allocation6], 0
    %s12 = smul.u32 0, 16
    %s13 = sld [smem:[#allocation4 + %s12]]
    %s14 = smul.addr %s13, 16
    %s15 = scalar_lea.hbm %s1, %s14
    // Predicated region
    $region2: #{tpu_custom_call.1} parent=1 // pred_check
      _
    $region3: #{tpu_custom_call.1} parent=1 // pred_check_branch
      %17 = sbr.rel target = $region5
    $region4: #{tpu_custom_call.1} parent=1 // pred_region
      %18 = sst [smem:[#allocation9]] [#allocation8]
      %19 = sst [smem:[#allocation10]] [#allocation7]
    $region5: #{tpu_custom_call.1} parent=1 // pred_fallthru
      _
    %21 = shalt.err (0)
    %s23 = sshll.u32 [#allocation5], 4
    %s24 = int_to_ptr.vmem [resolvable:$true] %s23
    %26 = dma.hbm_to_vmem [thread:$0]  %s15, 16, %s24, [#allocation2]
    %s27 = sadd.s32 %s12, 1
    %s28 = sld [smem:[#allocation4 + %s27]]
    %s29 = smul.addr %s28, 16
    %s30 = scalar_lea.hbm %s1, %s29
    %s31 = scalar_lea.vmem [#allocation5], 1
    %s32 = scalar_lea.sflag [#allocation2], 1
    // Predicated region
    $region6: #{tpu_custom_call.1} parent=1 // pred_check
      _
    $region7: #{tpu_custom_call.1} parent=1 // pred_check_branch
      %34 = sbr.rel target = $region9
    $region8: #{tpu_custom_call.1} parent=1 // pred_region
      %35 = sst [smem:[#allocation9]] [#allocation12]
      %36 = sst [smem:[#allocation10]] [#allocation11]
    $region9: #{tpu_custom_call.1} parent=1 // pred_fallthru
      _
    %38 = shalt.err (0)
    %s40 = sshll.u32 %s31, 4
    %s41 = int_to_ptr.vmem [resolvable:$true] %s40
    %43 = dma.hbm_to_vmem [thread:$0]  %s30, 16, %s41, %s32
    %s44 = sadd.s32 %s12, 2
    %s45 = sld [smem:[#allocation4 + %s44]]
    %s46 = smul.addr %s45, 16
    %s47 = scalar_lea.hbm %s1, %s46
    %s48 = scalar_lea.vmem [#allocation5], 2
    %s49 = scalar_lea.sflag [#allocation2], 2
    // Predicated region
    $region10: #{tpu_custom_call.1} parent=1 // pred_check
      _
    $region11: #{tpu_custom_call.1} parent=1 // pred_check_branch
      %51 = sbr.rel target = $region13
    $region12: #{tpu_custom_call.1} parent=1 // pred_region
      %52 = sst [smem:[#allocation9]] [#allocation14]
      %53 = sst [smem:[#allocation10]] [#allocation13]
    $region13: #{tpu_custom_call.1} parent=1 // pred_fallthru
      _
    %55 = shalt.err (0)
    %s57 = sshll.u32 %s48, 4
    %s58 = int_to_ptr.vmem [resolvable:$true] %s57
    %60 = dma.hbm_to_vmem [thread:$0]  %s47, 16, %s58, %s49
    %s61 = sadd.s32 %s12, 3
    %s62 = sld [smem:[#allocation4 + %s61]]
    %s63 = smul.addr %s62, 16
    %s64 = scalar_lea.hbm %s1, %s63
    %s65 = scalar_lea.vmem [#allocation5], 3
    %s66 = scalar_lea.sflag [#allocation2], 3
    // Predicated region
    $region14: #{tpu_custom_call.1} parent=1 // pred_check
      _
    $region15: #{tpu_custom_call.1} parent=1 // pred_check_branch
      %68 = sbr.rel target = $region17
    $region16: #{tpu_custom_call.1} parent=1 // pred_region
      %69 = sst [smem:[#allocation9]] [#allocation16]
      %70 = sst [smem:[#allocation10]] [#allocation15]
    $region17: #{tpu_custom_call.1} parent=1 // pred_fallthru
      _
    %72 = shalt.err (0)
    %s74 = sshll.u32 %s65, 4
    %s75 = int_to_ptr.vmem [resolvable:$true] %s74
    %77 = dma.hbm_to_vmem [thread:$0]  %s64, 16, %s75, %s66
    %s78 = sadd.s32 %s12, 4
    %s79 = sld [smem:[#allocation4 + %s78]]
    %s80 = smul.addr %s79, 16
    %s81 = scalar_lea.hbm %s1, %s80
    %s82 = scalar_lea.vmem [#allocation5], 4
    %s83 = scalar_lea.sflag [#allocation2], 4
    // Predicated region
    $region18: #{tpu_custom_call.1} parent=1 // pred_check
      _
    $region19: #{tpu_custom_call.1} parent=1 // pred_check_branch
      %85 = sbr.rel target = $region21
    $region20: #{tpu_custom_call.1} parent=1 // pred_region
      %86 = sst [smem:[#allocation9]] [#allocation18]
      %87 = sst [smem:[#allocation10]] [#allocation17]
    $region21: #{tpu_custom_call.1} parent=1 // pred_fallthru
      _
    %89 = shalt.err (0)
    %s91 = sshll.u32 %s82, 4
    %s92 = int_to_ptr.vmem [resolvable:$true] %s91
    %94 = dma.hbm_to_vmem [thread:$0]  %s81, 16, %s92, %s83
    %s95 = sadd.s32 %s12, 5
    %s96 = sld [smem:[#allocation4 + %s95]]
    %s97 = smul.addr %s96, 16
    %s98 = scalar_lea.hbm %s1, %s97
    %s99 = scalar_lea.vmem [#allocation5], 5
    %s100 = scalar_lea.sflag [#allocation2], 5
    // Predicated region
    $region22: #{tpu_custom_call.1} parent=1 // pred_check
      _
    $region23: #{tpu_custom_call.1} parent=1 // pred_check_branch
      %102 = sbr.rel target = $region25
    $region24: #{tpu_custom_call.1} parent=1 // pred_region
      %103 = sst [smem:[#allocation9]] [#allocation20]
      %104 = sst [smem:[#allocation10]] [#allocation19]
    $region25: #{tpu_custom_call.1} parent=1 // pred_fallthru
      _
    %106 = shalt.err (0)
    %s108 = sshll.u32 %s99, 4
    %s109 = int_to_ptr.vmem [resolvable:$true] %s108
    %111 = dma.hbm_to_vmem [thread:$0]  %s98, 16, %s109, %s100
    %s112 = sadd.s32 %s12, 6
    %s113 = sld [smem:[#allocation4 + %s112]]
    %s114 = smul.addr %s113, 16
    %s115 = scalar_lea.hbm %s1, %s114
    %s116 = scalar_lea.vmem [#allocation5], 6
    %s117 = scalar_lea.sflag [#allocation2], 6
    // Predicated region
    $region26: #{tpu_custom_call.1} parent=1 // pred_check
      _
    $region27: #{tpu_custom_call.1} parent=1 // pred_check_branch
      %119 = sbr.rel target = $region29
    $region28: #{tpu_custom_call.1} parent=1 // pred_region
      %120 = sst [smem:[#allocation9]] [#allocation22]
      %121 = sst [smem:[#allocation10]] [#allocation21]
    $region29: #{tpu_custom_call.1} parent=1 // pred_fallthru
      _
    %123 = shalt.err (0)
    %s125 = sshll.u32 %s116, 4
    %s126 = int_to_ptr.vmem [resolvable:$true] %s125
    %128 = dma.hbm_to_vmem [thread:$0]  %s115, 16, %s126, %s117
    %s129 = sadd.s32 %s12, 7
    %s130 = sld [smem:[#allocation4 + %s129]]
    %s131 = smul.addr %s130, 16
    %s132 = scalar_lea.hbm %s1, %s131
    %s133 = scalar_lea.vmem [#allocation5], 7
    %s134 = scalar_lea.sflag [#allocation2], 7
    // Predicated region
    $region30: #{tpu_custom_call.1} parent=1 // pred_check
      _
    $region31: #{tpu_custom_call.1} parent=1 // pred_check_branch
      %136 = sbr.rel target = $region33
    $region32: #{tpu_custom_call.1} parent=1 // pred_region
      %137 = sst [smem:[#allocation9]] [#allocation24]
      %138 = sst [smem:[#allocation10]] [#allocation23]
    $region33: #{tpu_custom_call.1} parent=1 // pred_fallthru
      _
    %140 = shalt.err (0)
    %s142 = sshll.u32 %s133, 4
    %s143 = int_to_ptr.vmem [resolvable:$true] %s142
    %145 = dma.hbm_to_vmem [thread:$0]  %s132, 16, %s143, %s134
    %s146 = sadd.s32 %s12, 8
    %s147 = sld [smem:[#allocation4 + %s146]]
    %s148 = smul.addr %s147, 16
    %s149 = scalar_lea.hbm %s1, %s148
    %s150 = scalar_lea.vmem [#allocation5], 8
    %s151 = scalar_lea.sflag [#allocation2], 8
    // Predicated region
    $region34: #{tpu_custom_call.1} parent=1 // pred_check
      _
    $region35: #{tpu_custom_call.1} parent=1 // pred_check_branch
      %153 = sbr.rel target = $region37
    $region36: #{tpu_custom_call.1} parent=1 // pred_region
      %154 = sst [smem:[#allocation9]] [#allocation26]
      %155 = sst [smem:[#allocation10]] [#allocation25]
    $region37: #{tpu_custom_call.1} parent=1 // pred_fallthru
      _
    %157 = shalt.err (0)
    %s159 = sshll.u32 %s150, 4
    %s160 = int_to_ptr.vmem [resolvable:$true] %s159
    %162 = dma.hbm_to_vmem [thread:$0]  %s149, 16, %s160, %s151
    %s163 = sadd.s32 %s12, 9
    %s164 = sld [smem:[#allocation4 + %s163]]
    %s165 = smul.addr %s164, 16
    %s166 = scalar_lea.hbm %s1, %s165
    %s167 = scalar_lea.vmem [#allocation5], 9
    %s168 = scalar_lea.sflag [#allocation2], 9
    // Predicated region
    $region38: #{tpu_custom_call.1} parent=1 // pred_check
      _
    $region39: #{tpu_custom_call.1} parent=1 // pred_check_branch
      %170 = sbr.rel target = $region41
    $region40: #{tpu_custom_call.1} parent=1 // pred_region
      %171 = sst [smem:[#allocation9]] [#allocation28]
      %172 = sst [smem:[#allocation10]] [#allocation27]
    $region41: #{tpu_custom_call.1} parent=1 // pred_fallthru
      _
    %174 = shalt.err (0)
    %s176 = sshll.u32 %s167, 4
    %s177 = int_to_ptr.vmem [resolvable:$true] %s176
    %179 = dma.hbm_to_vmem [thread:$0]  %s166, 16, %s177, %s168
    %s180 = sadd.s32 %s12, 10
    %s181 = sld [smem:[#allocation4 + %s180]]
    %s182 = smul.addr %s181, 16
    %s183 = scalar_lea.hbm %s1, %s182
    %s184 = scalar_lea.vmem [#allocation5], 10
    %s185 = scalar_lea.sflag [#allocation2], 10
    // Predicated region
    $region42: #{tpu_custom_call.1} parent=1 // pred_check
      _
    $region43: #{tpu_custom_call.1} parent=1 // pred_check_branch
      %187 = sbr.rel target = $region45
    $region44: #{tpu_custom_call.1} parent=1 // pred_region
      %188 = sst [smem:[#allocation9]] [#allocation30]
      %189 = sst [smem:[#allocation10]] [#allocation29]
    $region45: #{tpu_custom_call.1} parent=1 // pred_fallthru
      _
    %191 = shalt.err (0)
    %s193 = sshll.u32 %s184, 4
    %s194 = int_to_ptr.vmem [resolvable:$true] %s193
    %196 = dma.hbm_to_vmem [thread:$0]  %s183, 16, %s194, %s185
    %s197 = sadd.s32 %s12, 11
    %s198 = sld [smem:[#allocation4 + %s197]]
    %s199 = smul.addr %s198, 16
    %s200 = scalar_lea.hbm %s1, %s199
    %s201 = scalar_lea.vmem [#allocation5], 11
    %s202 = scalar_lea.sflag [#allocation2], 11
    // Predicated region
    $region46: #{tpu_custom_call.1} parent=1 // pred_check
      _
    $region47: #{tpu_custom_call.1} parent=1 // pred_check_branch
      %204 = sbr.rel target = $region49
    $region48: #{tpu_custom_call.1} parent=1 // pred_region
      %205 = sst [smem:[#allocation9]] [#allocation32]
      %206 = sst [smem:[#allocation10]] [#allocation31]
    $region49: #{tpu_custom_call.1} parent=1 // pred_fallthru
      _
    %208 = shalt.err (0)
    %s210 = sshll.u32 %s201, 4
    %s211 = int_to_ptr.vmem [resolvable:$true] %s210
    %213 = dma.hbm_to_vmem [thread:$0]  %s200, 16, %s211, %s202
    %s214 = sadd.s32 %s12, 12
    %s215 = sld [smem:[#allocation4 + %s214]]
    %s216 = smul.addr %s215, 16
    %s217 = scalar_lea.hbm %s1, %s216
    %s218 = scalar_lea.vmem [#allocation5], 12
    %s219 = scalar_lea.sflag [#allocation2], 12
    // Predicated region
    $region50: #{tpu_custom_call.1} parent=1 // pred_check
      _
    $region51: #{tpu_custom_call.1} parent=1 // pred_check_branch
      %221 = sbr.rel target = $region53
    $region52: #{tpu_custom_call.1} parent=1 // pred_region
      %222 = sst [smem:[#allocation9]] [#allocation34]
      %223 = sst [smem:[#allocation10]] [#allocation33]
    $region53: #{tpu_custom_call.1} parent=1 // pred_fallthru
      _
    %225 = shalt.err (0)
    %s227 = sshll.u32 %s218, 4
    %s228 = int_to_ptr.vmem [resolvable:$true] %s227
    %230 = dma.hbm_to_vmem [thread:$0]  %s217, 16, %s228, %s219
    %s231 = sadd.s32 %s12, 13
    %s232 = sld [smem:[#allocation4 + %s231]]
    %s233 = smul.addr %s232, 16
    %s234 = scalar_lea.hbm %s1, %s233
    %s235 = scalar_lea.vmem [#allocation5], 13
    %s236 = scalar_lea.sflag [#allocation2], 13
    // Predicated region
    $region54: #{tpu_custom_call.1} parent=1 // pred_check
      _
    $region55: #{tpu_custom_call.1} parent=1 // pred_check_branch
      %238 = sbr.rel target = $region57
    $region56: #{tpu_custom_call.1} parent=1 // pred_region
      %239 = sst [smem:[#allocation9]] [#allocation36]
      %240 = sst [smem:[#allocation10]] [#allocation35]
    $region57: #{tpu_custom_call.1} parent=1 // pred_fallthru
      _
    %242 = shalt.err (0)
    %s244 = sshll.u32 %s235, 4
    %s245 = int_to_ptr.vmem [resolvable:$true] %s244
    %247 = dma.hbm_to_vmem [thread:$0]  %s234, 16, %s245, %s236
    %s248 = sadd.s32 %s12, 14
    %s249 = sld [smem:[#allocation4 + %s248]]
    %s250 = smul.addr %s249, 16
    %s251 = scalar_lea.hbm %s1, %s250
    %s252 = scalar_lea.vmem [#allocation5], 14
    %s253 = scalar_lea.sflag [#allocation2], 14
    // Predicated region
    $region58: #{tpu_custom_call.1} parent=1 // pred_check
      _
    $region59: #{tpu_custom_call.1} parent=1 // pred_check_branch
      %255 = sbr.rel target = $region61
    $region60: #{tpu_custom_call.1} parent=1 // pred_region
      %256 = sst [smem:[#allocation9]] [#allocation38]
      %257 = sst [smem:[#allocation10]] [#allocation37]
    $region61: #{tpu_custom_call.1} parent=1 // pred_fallthru
      _
    %259 = shalt.err (0)
    %s261 = sshll.u32 %s252, 4
    %s262 = int_to_ptr.vmem [resolvable:$true] %s261
    %264 = dma.hbm_to_vmem [thread:$0]  %s251, 16, %s262, %s253
    %s265 = sadd.s32 %s12, 15
    %s266 = sld [smem:[#allocation4 + %s265]]
    %s267 = smul.addr %s266, 16
    %s268 = scalar_lea.hbm %s1, %s267
    %s269 = scalar_lea.vmem [#allocation5], 15
    %s270 = scalar_lea.sflag [#allocation2], 15
    // Predicated region
    $region62: #{tpu_custom_call.1} parent=1 // pred_check
      _
    $region63: #{tpu_custom_call.1} parent=1 // pred_check_branch
      %272 = sbr.rel target = $region65
    $region64: #{tpu_custom_call.1} parent=1 // pred_region
      %273 = sst [smem:[#allocation9]] [#allocation40]
      %274 = sst [smem:[#allocation10]] [#allocation39]
    $region65: #{tpu_custom_call.1} parent=1 // pred_fallthru
      _
    %276 = shalt.err (0)
    %s278 = sshll.u32 %s269, 4
    %s279 = int_to_ptr.vmem [resolvable:$true] %s278
    %281 = dma.hbm_to_vmem [thread:$0]  %s268, 16, %s279, %s270
    %s282 = smul.u32 1, 1
    %s283 = sshll.u32 %s282, 4
    %284 = dma.done [#allocation2], %s283
    %s285 = sshll.u32 %s282, 4
    %286 = dma.done %s32, %s285
    %s287 = sshll.u32 %s282, 4
    %288 = dma.done %s49, %s287
    %s289 = sshll.u32 %s282, 4
    %290 = dma.done %s66, %s289
    %s291 = sshll.u32 %s282, 4
    %292 = dma.done %s83, %s291
    %s293 = sshll.u32 %s282, 4
    %294 = dma.done %s100, %s293
    %s295 = sshll.u32 %s282, 4
    %296 = dma.done %s117, %s295
    %s297 = sshll.u32 %s282, 4
    %298 = dma.done %s134, %s297
    %s299 = sshll.u32 %s282, 4
    %300 = dma.done %s151, %s299
    %s301 = sshll.u32 %s282, 4
    %302 = dma.done %s168, %s301
    %s303 = sshll.u32 %s282, 4
    %304 = dma.done %s185, %s303
    %s305 = sshll.u32 %s282, 4
    %306 = dma.done %s202, %s305
    %s307 = sshll.u32 %s282, 4
    %308 = dma.done %s219, %s307
    %s309 = sshll.u32 %s282, 4
    %310 = dma.done %s236, %s309
    %s311 = sshll.u32 %s282, 4
    %312 = dma.done %s253, %s311
    %s313 = sshll.u32 %s282, 4
    %314 = dma.done %s270, %s313
    // Predicated region
    $region66: #{tpu_custom_call.1} parent=1 // pred_check
      _
    $region67: #{tpu_custom_call.1} parent=1 // pred_check_branch
      %316 = sbr.rel (0) target = $region69
    $region68: #{tpu_custom_call.1} parent=1 // pred_region
      %s318 = ssub.s32 256, 256
      %319 = vsyncadd [#allocation6], %s318
      %s320 = sshll.u32 [#allocation5], 4
      %s321 = int_to_ptr.vmem [resolvable:$true] %s320
      %326 = dma.vmem_to_hbm [thread:$0]  %s321, 256, %s2, [#allocation6], 128, 128, 8
    $region69: #{tpu_custom_call.1} parent=1 // pred_fallthru
      _
    // Predicated region
    $region70: #{tpu_custom_call.1} parent=1 // pred_check
      _
    $region71: #{tpu_custom_call.1} parent=1 // pred_check_branch
      %328 = sbr.rel (0) target = $region73
    $region72: #{tpu_custom_call.1} parent=1 // pred_region
      %329 = dma.done [#allocation6], 256
    $region73: #{tpu_custom_call.1} parent=1 // pred_fallthru
      _
    %330 = vsyncpa [#allocation6], 1
  %331 = vsyncmov [#allocation2]
  %s332 = vpop.sfrf %331
  %p333 = scmp.eq.s32.totalorder %s332, 0
  %p334 = pneg %p333
  %336 = shalt.err (%p334)
  %s337 = scalar_lea.sflag [#allocation2], 1
  %338 = vsyncmov %s337
  %s339 = vpop.sfrf %338
  %p340 = scmp.eq.s32.totalorder %s339, 0
  %p341 = pneg %p340
  %343 = shalt.err (%p341)
  %s344 = scalar_lea.sflag [#allocation2], 2
  %345 = vsyncmov %s344
  %s346 = vpop.sfrf %345
  %p347 = scmp.eq.s32.totalorder %s346, 0
  %p348 = pneg %p347
  %350 = shalt.err (%p348)
  %s351 = scalar_lea.sflag [#allocation2], 3
  %352 = vsyncmov %s351
  %s353 = vpop.sfrf %352
  %p354 = scmp.eq.s32.totalorder %s353, 0
  %p355 = pneg %p354
  %357 = shalt.err (%p355)
  %s358 = scalar_lea.sflag [#allocation2], 4
  %359 = vsyncmov %s358
  %s360 = vpop.sfrf %359
  %p361 = scmp.eq.s32.totalorder %s360, 0
  %p362 = pneg %p361
  %364 = shalt.err (%p362)
  %s365 = scalar_lea.sflag [#allocation2], 5
  %366 = vsyncmov %s365
  %s367 = vpop.sfrf %366
  %p368 = scmp.eq.s32.totalorder %s367, 0
  %p369 = pneg %p368
  %371 = shalt.err (%p369)
  %s372 = scalar_lea.sflag [#allocation2], 6
  %373 = vsyncmov %s372
  %s374 = vpop.sfrf %373
  %p375 = scmp.eq.s32.totalorder %s374, 0
  %p376 = pneg %p375
  %378 = shalt.err (%p376)
  %s379 = scalar_lea.sflag [#allocation2], 7
  %380 = vsyncmov %s379
  %s381 = vpop.sfrf %380
  %p382 = scmp.eq.s32.totalorder %s381, 0
  %p383 = pneg %p382
  %385 = shalt.err (%p383)
  %s386 = scalar_lea.sflag [#allocation2], 8
  %387 = vsyncmov %s386
  %s388 = vpop.sfrf %387
  %p389 = scmp.eq.s32.totalorder %s388, 0
  %p390 = pneg %p389
  %392 = shalt.err (%p390)
  %s393 = scalar_lea.sflag [#allocation2], 9
  %394 = vsyncmov %s393
  %s395 = vpop.sfrf %394
  %p396 = scmp.eq.s32.totalorder %s395, 0
  %p397 = pneg %p396
  %399 = shalt.err (%p397)
  %s400 = scalar_lea.sflag [#allocation2], 10
  %401 = vsyncmov %s400
  %s402 = vpop.sfrf %401
  %p403 = scmp.eq.s32.totalorder %s402, 0
  %p404 = pneg %p403
  %406 = shalt.err (%p404)
  %s407 = scalar_lea.sflag [#allocation2], 11
  %408 = vsyncmov %s407
  %s409 = vpop.sfrf %408
  %p410 = scmp.eq.s32.totalorder %s409, 0
  %p411 = pneg %p410
  %413 = shalt.err (%p411)
  %s414 = scalar_lea.sflag [#allocation2], 12
  %415 = vsyncmov %s414
  %s416 = vpop.sfrf %415
  %p417 = scmp.eq.s32.totalorder %s416, 0
  %p418 = pneg %p417
  %420 = shalt.err (%p418)
  %s421 = scalar_lea.sflag [#allocation2], 13
  %422 = vsyncmov %s421
  %s423 = vpop.sfrf %422
  %p424 = scmp.eq.s32.totalorder %s423, 0
  %p425 = pneg %p424
  %427 = shalt.err (%p425)
  %s428 = scalar_lea.sflag [#allocation2], 14
  %429 = vsyncmov %s428
  %s430 = vpop.sfrf %429
  %p431 = scmp.eq.s32.totalorder %s430, 0
  %p432 = pneg %p431
  %434 = shalt.err (%p432)
  %s435 = scalar_lea.sflag [#allocation2], 15
  %436 = vsyncmov %s435
  %s437 = vpop.sfrf %436
  %p438 = scmp.eq.s32.totalorder %s437, 0
  %p439 = pneg %p438
  %441 = shalt.err (%p439)
  %s442 = scalar_lea.sflag [#allocation2], 16
  %443 = vsyncmov %s442
  %s444 = vpop.sfrf %443
  %p445 = scmp.eq.s32.totalorder %s444, 0
  %p446 = pneg %p445
  %448 = shalt.err (%p446)
  %s449 = scalar_lea.sflag [#allocation2], 17
  %450 = vsyncmov %s449
  %s451 = vpop.sfrf %450
  %p452 = scmp.eq.s32.totalorder %s451, 0
  %p453 = pneg %p452
  %455 = shalt.err (%p453)
  %s456 = scalar_lea.sflag [#allocation2], 18
  %457 = vsyncmov %s456
  %s458 = vpop.sfrf %457
  %p459 = scmp.eq.s32.totalorder %s458, 0
  %p460 = pneg %p459
  %462 = shalt.err (%p460)
  %s463 = scalar_lea.sflag [#allocation2], 19
  %464 = vsyncmov %s463
  %s465 = vpop.sfrf %464
  %p466 = scmp.eq.s32.totalorder %s465, 0
  %p467 = pneg %p466
  %469 = shalt.err (%p467)
  %s470 = scalar_lea.sflag [#allocation2], 20
  %471 = vsyncmov %s470
  %s472 = vpop.sfrf %471
  %p473 = scmp.eq.s32.totalorder %s472, 0
  %p474 = pneg %p473
  %476 = shalt.err (%p474)
  %s477 = scalar_lea.sflag [#allocation2], 21
  %478 = vsyncmov %s477
  %s479 = vpop.sfrf %478
  %p480 = scmp.eq.s32.totalorder %s479, 0
  %p481 = pneg %p480
  %483 = shalt.err (%p481)
  %s484 = scalar_lea.sflag [#allocation2], 22
  %485 = vsyncmov %s484
  %s486 = vpop.sfrf %485
  %p487 = scmp.eq.s32.totalorder %s486, 0
  %p488 = pneg %p487
  %490 = shalt.err (%p488)
  %s491 = scalar_lea.sflag [#allocation2], 23
  %492 = vsyncmov %s491
  %s493 = vpop.sfrf %492
  %p494 = scmp.eq.s32.totalorder %s493, 0
  %p495 = pneg %p494
  %497 = shalt.err (%p495)
  %s498 = scalar_lea.sflag [#allocation2], 24
  %499 = vsyncmov %s498
  %s500 = vpop.sfrf %499
  %p501 = scmp.eq.s32.totalorder %s500, 0
  %p502 = pneg %p501
  %504 = shalt.err (%p502)
  %s505 = scalar_lea.sflag [#allocation2], 25
  %506 = vsyncmov %s505
  %s507 = vpop.sfrf %506
  %p508 = scmp.eq.s32.totalorder %s507, 0
  %p509 = pneg %p508
  %511 = shalt.err (%p509)
  %s512 = scalar_lea.sflag [#allocation2], 26
  %513 = vsyncmov %s512
  %s514 = vpop.sfrf %513
  %p515 = scmp.eq.s32.totalorder %s514, 0
  %p516 = pneg %p515
  %518 = shalt.err (%p516)
  %s519 = scalar_lea.sflag [#allocation2], 27
  %520 = vsyncmov %s519
  %s521 = vpop.sfrf %520
  %p522 = scmp.eq.s32.totalorder %s521, 0
  %p523 = pneg %p522
  %525 = shalt.err (%p523)
  %s526 = scalar_lea.sflag [#allocation2], 28
  %527 = vsyncmov %s526
  %s528 = vpop.sfrf %527
  %p529 = scmp.eq.s32.totalorder %s528, 0
  %p530 = pneg %p529
  %532 = shalt.err (%p530)
  %s533 = scalar_lea.sflag [#allocation2], 29
  %534 = vsyncmov %s533
  %s535 = vpop.sfrf %534
  %p536 = scmp.eq.s32.totalorder %s535, 0
  %p537 = pneg %p536
  %539 = shalt.err (%p537)
  %s540 = scalar_lea.sflag [#allocation2], 30
  %541 = vsyncmov %s540
  %s542 = vpop.sfrf %541
  %p543 = scmp.eq.s32.totalorder %s542, 0
  %p544 = pneg %p543
  %546 = shalt.err (%p544)
  %s547 = scalar_lea.sflag [#allocation2], 31
  %548 = vsyncmov %s547
  %s549 = vpop.sfrf %548
  %p550 = scmp.eq.s32.totalorder %s549, 0
  %p551 = pneg %p550
  %553 = shalt.err (%p551)

</llo_original>
